<compile_context>
chip_gen: v6e
topology: v6e:2x2x1
jax: 0.10.0
libtpu: 0.0.40
codegen_flags: <defaults>
</compile_context>

<pallas_src>
import functools
from math import prod

import jax
import jax.numpy as jnp
from jax.experimental import pallas as pl
from jax.experimental.pallas import tpu as pltpu


# ============================================================================
# Deterministic parameter construction (mirrors the PyTorch module structure)
# ============================================================================

class ParamGen:
    def __init__(self, key):
        self.key = key
        self.count = 0

    def next_key(self):
        self.count += 1
        return jax.random.fold_in(self.key, self.count)

    def linear(self, fan_in, fan_out):
        k = 1.0 / (float(fan_in) ** 0.5)
        w = jax.random.uniform(self.next_key(), (fan_in, fan_out),
                               minval=-k, maxval=k, dtype=jnp.float32)
        b = jax.random.uniform(self.next_key(), (fan_out,),
                               minval=-k, maxval=k, dtype=jnp.float32)
        return (w, b)


def build_pipe(gen, sizes):
    return [gen.linear(sizes[i], sizes[i + 1]) for i in range(len(sizes) - 1)]


def _make_sizes(embed_dim, depth, out_dim):
    size_step = int((embed_dim - out_dim) / depth)
    size_step = max(1, size_step)
    sizes = [i for i in range(embed_dim, out_dim, -size_step)]
    sizes = sizes[0:depth] + [out_dim]
    short = depth - len(sizes)
    if short > 0:
        sizes = sizes + [out_dim] * short
    return sizes


def build_rootlevel(gen, sizes, sizes_pr_level, forks):
    my_sizes = sizes if len(forks) < 1 else sizes[:sizes_pr_level]
    node = {'pipe': build_pipe(gen, my_sizes), 'children': []}
    if len(forks) > 0:
        for _ in range(forks[0]):
            node['children'].append(
                build_rootlevel(gen, sizes[sizes_pr_level - 1:],
                                sizes_pr_level, forks[1:]))
    return node


def build_root(gen, embed_dim, forks, depth, out_dim):
    sizes_pr_level = depth // len(forks)
    sizes = _make_sizes(embed_dim, depth, out_dim)
    return [build_rootlevel(gen, sizes, sizes_pr_level, forks[1:])
            for _ in range(forks[0])]


def build_tree(gen, emed_dim, merges, depth, out_dim, leafs_on_top, patch_cnt):
    sizes_pr_level = depth // len(merges)
    sizes = _make_sizes(emed_dim, depth, out_dim)
    levels = []
    for i, merg in enumerate(merges):
        leafs_on_lvl = leafs_on_top // prod(merges[:i])
        pipes_cnt_on_lvl = leafs_on_lvl // merg
        leafs_pr_pipe = leafs_on_lvl // pipes_cnt_on_lvl
        fst_s = i * sizes_pr_level - 1
        lst_s = (i + 1) * sizes_pr_level
        if i == 0:
            fst_s = 0
        if i == len(merges) - 1:
            lst_s = len(sizes)
        sizes_on_lvl = list(sizes[fst_s:lst_s])
        sizes_on_lvl[0] = sizes_on_lvl[0] * leafs_pr_pipe
        if i == 0:
            sizes_on_lvl[0] = sizes_on_lvl[0] * patch_cnt
        pipes = [build_pipe(gen, sizes_on_lvl) for _ in range(pipes_cnt_on_lvl)]
        levels.append({'pipes': pipes, 'leafs_pr_pipe': leafs_pr_pipe})
    return levels


def build_patch_embed(gen, img_size, channels, patch_size, emb_dim):
    patch_dim = patch_size * patch_size * channels
    n_patches = (img_size // patch_size) ** 2
    return {
        'proj': gen.linear(patch_dim, emb_dim),
        'cls': 0.02 * jax.random.normal(gen.next_key(), (1, 1, emb_dim),
                                        dtype=jnp.float32),
        'pos': 0.02 * jax.random.normal(gen.next_key(), (1, n_patches + 1, emb_dim),
                                        dtype=jnp.float32),
    }


def build_tit(gen, *, img_size, channels, patch_size, classes, embed_dim,
              root_forks, root_depth, root_out_dim,
              tree_merges, tree_depth, tree_out_dim):
    if prod(root_forks) != prod(tree_merges):
        raise ValueError('Product of forks must equal product of merges')
    if embed_dim < root_out_dim or root_out_dim < tree_out_dim:
        raise ValueError('embed_dim >= root_out_dim >= tree_out_dim required')
    patches_pr_img = (img_size // patch_size) ** 2 + 1
    return {
        # BatchNorm2d defaults: gamma=1, beta=0, running_mean=0, running_var=1
        'bn': (jnp.ones((channels,), jnp.float32), jnp.zeros((channels,), jnp.float32),
               jnp.zeros((channels,), jnp.float32), jnp.ones((channels,), jnp.float32)),
        'patch_embed': build_patch_embed(gen, img_size, channels, patch_size, embed_dim),
        'root': build_root(gen, embed_dim, root_forks, root_depth, root_out_dim),
        'tree': build_tree(gen, root_out_dim, tree_merges, tree_depth, tree_out_dim,
                           prod(root_forks), patches_pr_img),
        'classifier': gen.linear(tree_out_dim, classes),
    }


# ============================================================================
# Wrapper-side re-expression of Root / Tree as block-structured dense layers
# ============================================================================

def _root_dense_layers(root_nodes, emb_dim):
    """Re-express the recursive Root as dense layers over branch-concatenated
    activations.  Siblings at a fork consume the same parent columns, so each
    depth level becomes ONE matmul; unrelated branches get exact-zero blocks.
    Returns ([(W, b)], leaf_out_dims); the last layer's columns are ordered
    leaf-major in depth-first leaf order (matching the PyTorch traversal)."""
    branches = [{'rem': list(n['pipe']), 'kids': n['children'],
                 'off': 0, 'dim': emb_dim} for n in root_nodes]
    width = emb_dim
    layers = []
    while True:
        # Replace exhausted branches by their children (children share the
        # parent's output columns) until every active branch has a layer left.
        changed = True
        while changed:
            changed = False
            nxt = []
            for b in branches:
                if not b['rem'] and b['kids']:
                    for k in b['kids']:
                        nxt.append({'rem': list(k['pipe']), 'kids': k['children'],
                                    'off': b['off'], 'dim': b['dim']})
                    changed = True
                else:
                    nxt.append(b)
            branches = nxt
        if all(not b['rem'] for b in branches):
            break
        assert all(b['rem'] for b in branches), 'Root is not level-synchronous'
        douts = [b['rem'][0][0].shape[1] for b in branches]
        w_full = jnp.zeros((width, sum(douts)), jnp.float32)
        biases, off = [], 0
        for b, dout in zip(branches, douts):
            w, bias = b['rem'].pop(0)
            w_full = w_full.at[b['off']:b['off'] + b['dim'], off:off + dout].set(w)
            biases.append(bias)
            b['off'], b['dim'] = off, dout
            off += dout
        layers.append((w_full, jnp.concatenate(biases).reshape(1, -1)))
        width = sum(douts)
    return layers, [b['dim'] for b in branches]


def _block_diag_layer(layer_list):
    """Fuse the per-pipe (W, b) of one tree layer into a block-diagonal layer."""
    ws = [w for (w, _b) in layer_list]
    bs = [b for (_w, b) in layer_list]
    w_full = jnp.zeros((sum(w.shape[0] for w in ws),
                        sum(w.shape[1] for w in ws)), jnp.float32)
    oi = oo = 0
    for w in ws:
        w_full = w_full.at[oi:oi + w.shape[0], oo:oo + w.shape[1]].set(w)
        oi += w.shape[0]
        oo += w.shape[1]
    return w_full, jnp.concatenate(bs).reshape(1, -1)


def _tree_dense_layers(tree_levels, n_leaves, root_out, np1):
    """Returns (w_tok, b0, dense_layers):
      * level-0 first layer as per-token weights w_tok[t] of shape
        (n_leaves*root_out, sum(pipe out dims)): all level-0 pipes fused along
        the output dim, zero blocks for leaves a pipe does not consume.  The
        reference's 'flatten leaf (token, feature) + concat' is absorbed into
        the (token -> weight row-block) indexing.
      * every remaining tree layer block-diagonally fused across its pipes."""
    lvl0 = tree_levels[0]
    pipes0, lpp0 = lvl0['pipes'], lvl0['leafs_pr_pipe']
    d_outs = [p[0][0].shape[1] for p in pipes0]
    d0_tot = sum(d_outs)
    w_tok = jnp.zeros((np1, n_leaves * root_out, d0_tot), jnp.float32)
    b0s, out_off = [], 0
    for p_idx, pipe in enumerate(pipes0):
        w0, b0 = pipe[0]
        d0 = w0.shape[1]
        for ll in range(lpp0):
            leaf = p_idx * lpp0 + ll
            for t in range(np1):
                rows = w0[(ll * np1 + t) * root_out:
                          (ll * np1 + t + 1) * root_out, :]
                w_tok = w_tok.at[t, leaf * root_out:(leaf + 1) * root_out,
                                 out_off:out_off + d0].set(rows)
        b0s.append(b0)
        out_off += d0
    b0_cat = jnp.concatenate(b0s).reshape(1, -1)

    dense = []
    for k in range(1, len(pipes0[0])):                      # rest of level 0
        dense.append(_block_diag_layer([pipe[k] for pipe in pipes0]))
    for lvl in tree_levels[1:]:                             # deeper levels
        pipes = lvl['pipes']
        for k in range(len(pipes[0])):
            dense.append(_block_diag_layer([pipe[k] for pipe in pipes]))
    return w_tok, b0_cat, dense


def _pick_block_batch(B, np1, max_rows=1024):
    """Largest multiple-of-8 divisor of B keeping <= max_rows token rows/step."""
    best = B
    for cand in range(8, B + 1, 8):
        if B % cand == 0 and cand * np1 <= max_rows:
            best = cand
    return best


# ============================================================================
# Fused forward pass: one pallas_call, grid over batch blocks
# ============================================================================

def tit_forward(params, x, patch_size, block_batch=None, use_bf16=True):
    B, C, H, W = x.shape
    ph = pw = patch_size
    nh, nw = H // ph, W // pw
    n_patches = nh * nw
    np1 = n_patches + 1
    eps = 1e-5
    mm_dtype = jnp.bfloat16 if use_bf16 else jnp.float32

    # ---- Fold BatchNorm2d (eval / running stats) into the patch projection ----
    gamma, beta, mean, var = params['bn']
    scale = gamma / jnp.sqrt(var + eps)
    shift = beta - mean * scale
    wproj, bproj = params['patch_embed']['proj']
    emb_dim = wproj.shape[1]
    patch_dim = ph * pw * C
    scale_rows = jnp.tile(scale, ph * pw)     # column layout (ph, pw, c): c = j % C
    shift_rows = jnp.tile(shift, ph * pw)
    w_fold = wproj * scale_rows[:, None]
    b_fold = bproj + shift_rows @ wproj

    # ---- Per-token additive term: CLS+pos for token 0, pos+bias for patches ----
    cls = params['patch_embed']['cls'][0, 0]      # (E,)
    pos = params['patch_embed']['pos'][0]         # (N+1, E)
    add_img = jnp.concatenate(
        [(cls + pos[0])[None, :], pos[1:] + b_fold[None, :]], axis=0)  # (N+1, E)
    # TODO(synk): patch_emb dropout (p=0.1) skipped -- inference mode identity.

    # ---- Batch tiling ----
    bt = _pick_block_batch(B, np1) if block_batch is None else block_batch
    assert B % bt == 0, (B, bt)
    n_blocks = B // bt
    mb = np1 * bt                                 # token rows per grid step

    # ---- Patch extraction -> (n_blocks*mb, patch_dim), token-major per block,
    #      with a zero row in every CLS slot (its value comes from add_img) ----
    xp = x.reshape(B, C, nh, ph, nw, pw)
    xp = jnp.transpose(xp, (0, 2, 4, 3, 5, 1)).reshape(B, n_patches, patch_dim)
    xp = xp.reshape(n_blocks, bt, n_patches, patch_dim).transpose(0, 2, 1, 3)
    xp = jnp.concatenate(
        [jnp.zeros((n_blocks, 1, bt, patch_dim), xp.dtype), xp], axis=1)
    xp_flat = xp.reshape(n_blocks * mb, patch_dim).astype(mm_dtype)

    add_blk = jnp.repeat(add_img, bt, axis=0)     # (mb, E): row t*bt+b -> token t

    # ---- Root / Tree re-expressed as block-structured dense layers ----
    root_layers, leaf_dims = _root_dense_layers(params['root'], emb_dim)
    n_leaves, root_out = len(leaf_dims), leaf_dims[0]
    assert all(d == root_out for d in leaf_dims)
    w_tok, b0_cat, tree_layers = _tree_dense_layers(
        params['tree'], n_leaves, root_out, np1)

    wc, bc = params['classifier']
    classes = wc.shape[1]
    cpad = 128                                    # lane-dense final store
    wc_pad = jnp.zeros((wc.shape[0], cpad), jnp.float32).at[:, :classes].set(wc)
    bc_pad = jnp.zeros((1, cpad), jnp.float32).at[0, :classes].set(bc)

    # ---- Operand list: xp, add, w_proj, (root W,b)*, w_tok, b0, (tree W,b)*, wc, bc
    ops = [xp_flat, add_blk, w_fold.astype(mm_dtype)]
    for (w, b) in root_layers:
        ops += [w.astype(mm_dtype), b]
    ops += [w_tok.astype(mm_dtype), b0_cat]
    for (w, b) in tree_layers:
        ops += [w.astype(mm_dtype), b]
    ops += [wc_pad.astype(mm_dtype), bc_pad]

    n_root, n_tree = len(root_layers), len(tree_layers)

    def resident(a):                              # whole array, VMEM-resident across steps
        zeros = (0,) * a.ndim
        return pl.BlockSpec(a.shape, lambda i, _z=zeros: _z)

    in_specs = [pl.BlockSpec((mb, patch_dim), lambda i: (i, 0)),
                resident(add_blk)] + [resident(a) for a in ops[2:]]

    # ---- The fused kernel: projection + Root + Tree + classifier per block ----
    def kernel(*refs):
        o_ref = refs[-1]
        xp_ref, add_ref, wp_ref = refs[0], refs[1], refs[2]
        idx = 3

        # Patch projection (BN folded).  CLS rows are zero in xp so they take
        # their value purely from add_ref (cls + pos).
        h = jnp.dot(xp_ref[...], wp_ref[...],
                    preferred_element_type=jnp.float32) + add_ref[...]

        # Root: sibling-fused / block-diagonal Linear+ReLU layers (weights read
        # lazily at point of use to keep live ranges short).
        for _ in range(n_root):
            w_ref, b_ref = refs[idx], refs[idx + 1]
            idx += 2
            h = jnp.maximum(
                jnp.dot(h.astype(mm_dtype), w_ref[...],
                        preferred_element_type=jnp.float32) + b_ref[...], 0.0)

        # Tree level 0: "flatten leaves per image + concat" of the reference
        # becomes an accumulation over tokens (rows are token-major per block);
        # consecutive dots into the same accumulator (MRB-friendly on v7x).
        wtok_ref, b0_ref = refs[idx], refs[idx + 1]
        idx += 2
        acc = b0_ref[...]                         # (1, d0) -> broadcasts on first add
        for t in range(np1):
            h_t = h[t * bt:(t + 1) * bt, :].astype(mm_dtype)
            acc = acc + jnp.dot(h_t, wtok_ref[t],
                                preferred_element_type=jnp.float32)
        g = jnp.maximum(acc, 0.0)

        # Remaining Tree levels: block-diagonal Linear+ReLU layers.
        for _ in range(n_tree):
            w_ref, b_ref = refs[idx], refs[idx + 1]
            idx += 2
            g = jnp.maximum(
                jnp.dot(g.astype(mm_dtype), w_ref[...],
                        preferred_element_type=jnp.float32) + b_ref[...], 0.0)

        # Classifier head, padded to 128 lanes (unmasked store).
        wc_ref, bc_ref = refs[idx], refs[idx + 1]
        o_ref[...] = jnp.dot(g.astype(mm_dtype), wc_ref[...],
                             preferred_element_type=jnp.float32) + bc_ref[...]

    # ---- Advisory cost estimate ----
    m_tok = B * np1
    flops = 2 * m_tok * patch_dim * emb_dim
    flops += sum(2 * m_tok * w.shape[0] * w.shape[1] for (w, _b) in root_layers)
    flops += 2 * m_tok * w_tok.shape[1] * w_tok.shape[2]
    flops += sum(2 * B * w.shape[0] * w.shape[1] for (w, _b) in tree_layers)
    flops += 2 * B * wc_pad.shape[0] * cpad
    bytes_acc = sum(int(a.size) * a.dtype.itemsize for a in ops) + B * cpad * 4

    out_pad = pl.pallas_call(
        kernel,
        grid_spec=pltpu.PrefetchScalarGridSpec(
            num_scalar_prefetch=0,
            grid=(n_blocks,),
            in_specs=in_specs,
            out_specs=pl.BlockSpec((bt, cpad), lambda i: (i, 0)),
        ),
        out_shape=jax.ShapeDtypeStruct((B, cpad), jnp.float32),
        compiler_params=pltpu.CompilerParams(
            dimension_semantics=("parallel",),
            vmem_limit_bytes=32 * 1024 * 1024),
        cost_estimate=pl.CostEstimate(flops=int(flops), transcendentals=0,
                                      bytes_accessed=int(bytes_acc)),
    )(*ops)
    return out_pad[:, :classes]


# ----------------------------------------------------------------------------
# Plain-jnp reference (mirrors the PyTorch module, BN in eval mode)
# ----------------------------------------------------------------------------

def tit_forward_reference(params, x, patch_size):
    gamma, beta, mean, var = params['bn']
    eps = 1e-5
    xb = (x - mean[None, :, None, None]) * (
        gamma[None, :, None, None] / jnp.sqrt(var[None, :, None, None] + eps)
    ) + beta[None, :, None, None]
    B, C, H, W = x.shape
    ph = pw = patch_size
    nh, nw = H // ph, W // pw
    xp = xb.reshape(B, C, nh, ph, nw, pw)
    xp = jnp.transpose(xp, (0, 2, 4, 3, 5, 1)).reshape(B, nh * nw, ph * pw * C)
    wproj, bproj = params['patch_embed']['proj']
    emb = xp @ wproj + bproj
    cls = jnp.broadcast_to(params['patch_embed']['cls'], (B, 1, emb.shape[-1]))
    h = jnp.concatenate([cls, emb], axis=1) + params['patch_embed']['pos']

    def pipe(p, t):
        for (w, b) in p:
            t = jnp.maximum(t @ w + b, 0.0)
        return t

    def rootlevel(node, t):
        t = pipe(node['pipe'], t)
        out = []
        for kid in node['children']:
            out = out + rootlevel(kid, t)
        return out if out else [t]

    leaves = []
    for kid in params['root']:
        leaves = leaves + rootlevel(kid, h)

    xs = [t.reshape(t.shape[0], -1) for t in leaves]
    for lvl in params['tree']:
        outs = []
        pipes, lpp = lvl['pipes'], lvl['leafs_pr_pipe']
        for i, p in enumerate(pipes):
            xin = (jnp.concatenate(xs, axis=1) if len(pipes) == 1
                   else jnp.concatenate(xs[i * lpp:(i + 1) * lpp], axis=1))
            outs.append(pipe(p, xin))
        xs = outs
    wc, bc = params['classifier']
    return xs[0] @ wc + bc


# ----------------------------------------------------------------------------
# Demo
# ----------------------------------------------------------------------------

if __name__ == "__main__":
    B = 16
    IMG, CH, PATCH = 32, 3, 16
    CLASSES = 5
    EMBED = 32
    ROOT_FORKS, ROOT_DEPTH, ROOT_OUT = [2, 2], 4, 16
    TREE_MERGES, TREE_DEPTH, TREE_OUT = [2, 2], 4, 8

    key = jax.random.PRNGKey(0)
    gen = ParamGen(key)
    params = build_tit(
        gen,
        img_size=IMG, channels=CH, patch_size=PATCH, classes=CLASSES,
        embed_dim=EMBED,
        root_forks=ROOT_FORKS, root_depth=ROOT_DEPTH, root_out_dim=ROOT_OUT,
        tree_merges=TREE_MERGES, tree_depth=TREE_DEPTH, tree_out_dim=TREE_OUT,
    )

    x = jax.random.normal(jax.random.fold_in(key, 12345), (B, CH, IMG, IMG),
                          dtype=jnp.float32)

    ref = tit_forward_reference(params, x, PATCH)

    # Structural check: f32 matmul path, tight tolerance.
    fwd_f32 = jax.jit(functools.partial(tit_forward, params, patch_size=PATCH,
                                        block_batch=8, use_bf16=False))
    out_f32 = jax.block_until_ready(fwd_f32(x))
    assert out_f32.shape == (B, CLASSES), out_f32.shape
    assert jnp.allclose(out_f32, ref, rtol=1e-3, atol=1e-3)

    # Performance config: bf16 MXU inputs (f32 accumulation), 2-step batch grid.
    fwd = jax.jit(functools.partial(tit_forward, params, patch_size=PATCH,
                                    block_batch=8))
    out = jax.block_until_ready(fwd(x))
    assert out.shape == (B, CLASSES), out.shape
    assert bool(jnp.all(jnp.isfinite(out)))
    assert jnp.allclose(out, ref, rtol=3e-2, atol=3e-2)

    print("KERNEL_OK")
</pallas_src>

<mosaic_0001>
module attributes {stable_mosaic.version = 11 : i64} {
  func.func @kernel(%arg0: i32, %arg1: memref<40x768xf32, #tpu.memory_space<vmem>>, %arg2: memref<40x32xf32, #tpu.memory_space<vmem>>, %arg3: memref<768x32xf32, #tpu.memory_space<vmem>>, %arg4: memref<32x56xf32, #tpu.memory_space<vmem>>, %arg5: memref<1x56xf32, #tpu.memory_space<vmem>>, %arg6: memref<56x96xf32, #tpu.memory_space<vmem>>, %arg7: memref<1x96xf32, #tpu.memory_space<vmem>>, %arg8: memref<96x80xf32, #tpu.memory_space<vmem>>, %arg9: memref<1x80xf32, #tpu.memory_space<vmem>>, %arg10: memref<80x64xf32, #tpu.memory_space<vmem>>, %arg11: memref<1x64xf32, #tpu.memory_space<vmem>>, %arg12: memref<5x64x28xf32, #tpu.memory_space<vmem>>, %arg13: memref<1x28xf32, #tpu.memory_space<vmem>>, %arg14: memref<28x12xf32, #tpu.memory_space<vmem>>, %arg15: memref<1x12xf32, #tpu.memory_space<vmem>>, %arg16: memref<12x10xf32, #tpu.memory_space<vmem>>, %arg17: memref<1x10xf32, #tpu.memory_space<vmem>>, %arg18: memref<10x8xf32, #tpu.memory_space<vmem>>, %arg19: memref<1x8xf32, #tpu.memory_space<vmem>>, %arg20: memref<8x128xf32, #tpu.memory_space<vmem>>, %arg21: memref<1x128xf32, #tpu.memory_space<vmem>>, %arg22: memref<8x128xf32, #tpu.memory_space<vmem>>) attributes {dimension_semantics = [#tpu.dimension_semantics<parallel>], iteration_bounds = array<i64: 2>, scalar_prefetch = 0 : i64, scratch_operands = 0 : i64, tpu.core_type = #tpu.core_type<tc>, window_params = [{transform_indices = @transform_0, window_bounds = array<i64: 40, 768>}, {pipeline_mode = #tpu.pipeline_mode<synchronous>, transform_indices = @transform_1, window_bounds = array<i64: 40, 32>}, {pipeline_mode = #tpu.pipeline_mode<synchronous>, transform_indices = @transform_2, window_bounds = array<i64: 768, 32>}, {pipeline_mode = #tpu.pipeline_mode<synchronous>, transform_indices = @transform_3, window_bounds = array<i64: 32, 56>}, {pipeline_mode = #tpu.pipeline_mode<synchronous>, transform_indices = @transform_4, window_bounds = array<i64: 1, 56>}, {pipeline_mode = #tpu.pipeline_mode<synchronous>, transform_indices = @transform_5, window_bounds = array<i64: 56, 96>}, {pipeline_mode = #tpu.pipeline_mode<synchronous>, transform_indices = @transform_6, window_bounds = array<i64: 1, 96>}, {pipeline_mode = #tpu.pipeline_mode<synchronous>, transform_indices = @transform_7, window_bounds = array<i64: 96, 80>}, {pipeline_mode = #tpu.pipeline_mode<synchronous>, transform_indices = @transform_8, window_bounds = array<i64: 1, 80>}, {pipeline_mode = #tpu.pipeline_mode<synchronous>, transform_indices = @transform_9, window_bounds = array<i64: 80, 64>}, {pipeline_mode = #tpu.pipeline_mode<synchronous>, transform_indices = @transform_10, window_bounds = array<i64: 1, 64>}, {pipeline_mode = #tpu.pipeline_mode<synchronous>, transform_indices = @transform_11, window_bounds = array<i64: 5, 64, 28>}, {pipeline_mode = #tpu.pipeline_mode<synchronous>, transform_indices = @transform_12, window_bounds = array<i64: 1, 28>}, {pipeline_mode = #tpu.pipeline_mode<synchronous>, transform_indices = @transform_13, window_bounds = array<i64: 28, 12>}, {pipeline_mode = #tpu.pipeline_mode<synchronous>, transform_indices = @transform_14, window_bounds = array<i64: 1, 12>}, {pipeline_mode = #tpu.pipeline_mode<synchronous>, transform_indices = @transform_15, window_bounds = array<i64: 12, 10>}, {pipeline_mode = #tpu.pipeline_mode<synchronous>, transform_indices = @transform_16, window_bounds = array<i64: 1, 10>}, {pipeline_mode = #tpu.pipeline_mode<synchronous>, transform_indices = @transform_17, window_bounds = array<i64: 10, 8>}, {pipeline_mode = #tpu.pipeline_mode<synchronous>, transform_indices = @transform_18, window_bounds = array<i64: 1, 8>}, {pipeline_mode = #tpu.pipeline_mode<synchronous>, transform_indices = @transform_19, window_bounds = array<i64: 8, 128>}, {pipeline_mode = #tpu.pipeline_mode<synchronous>, transform_indices = @transform_20, window_bounds = array<i64: 1, 128>}, {transform_indices = @transform_21, window_bounds = array<i64: 8, 128>}]} {
    %c0 = arith.constant 0 : index
    %c0_0 = arith.constant 0 : index
    %0 = vector.load %arg1[%c0, %c0_0] : memref<40x768xf32, #tpu.memory_space<vmem>>, vector<40x768xf32>
    %c0_1 = arith.constant 0 : index
    %c0_2 = arith.constant 0 : index
    %1 = vector.load %arg3[%c0_1, %c0_2] : memref<768x32xf32, #tpu.memory_space<vmem>>, vector<768x32xf32>
    %cst = arith.constant dense<0.000000e+00> : vector<40x32xf32>
    %2 = tpu.matmul %0, %1, %cst {dimension_numbers = #tpu.dot_dimension_numbers<[1], [0], [0], [1], [0, 0, 1, 1], [], []>} : vector<40x768xf32>, vector<768x32xf32>, vector<40x32xf32> -> vector<40x32xf32>
    %c0_3 = arith.constant 0 : index
    %c0_4 = arith.constant 0 : index
    %3 = vector.load %arg2[%c0_3, %c0_4] : memref<40x32xf32, #tpu.memory_space<vmem>>, vector<40x32xf32>
    %4 = arith.addf %2, %3 : vector<40x32xf32>
    %c0_5 = arith.constant 0 : index
    %c0_6 = arith.constant 0 : index
    %5 = vector.load %arg4[%c0_5, %c0_6] : memref<32x56xf32, #tpu.memory_space<vmem>>, vector<32x56xf32>
    %cst_7 = arith.constant dense<0.000000e+00> : vector<40x56xf32>
    %6 = tpu.matmul %4, %5, %cst_7 {dimension_numbers = #tpu.dot_dimension_numbers<[1], [0], [0], [1], [0, 0, 1, 1], [], []>} : vector<40x32xf32>, vector<32x56xf32>, vector<40x56xf32> -> vector<40x56xf32>
    %c0_8 = arith.constant 0 : index
    %c0_9 = arith.constant 0 : index
    %7 = vector.load %arg5[%c0_8, %c0_9] : memref<1x56xf32, #tpu.memory_space<vmem>>, vector<1x56xf32>
    %8 = vector.broadcast %7 : vector<1x56xf32> to vector<40x56xf32>
    %9 = arith.addf %6, %8 : vector<40x56xf32>
    %cst_10 = arith.constant 0.000000e+00 : f32
    %10 = vector.broadcast %cst_10 : f32 to vector<40x56xf32>
    %11 = arith.maximumf %9, %10 : vector<40x56xf32>
    %c0_11 = arith.constant 0 : index
    %c0_12 = arith.constant 0 : index
    %12 = vector.load %arg6[%c0_11, %c0_12] : memref<56x96xf32, #tpu.memory_space<vmem>>, vector<56x96xf32>
    %cst_13 = arith.constant dense<0.000000e+00> : vector<40x96xf32>
    %13 = tpu.matmul %11, %12, %cst_13 {dimension_numbers = #tpu.dot_dimension_numbers<[1], [0], [0], [1], [0, 0, 1, 1], [], []>} : vector<40x56xf32>, vector<56x96xf32>, vector<40x96xf32> -> vector<40x96xf32>
    %c0_14 = arith.constant 0 : index
    %c0_15 = arith.constant 0 : index
    %14 = vector.load %arg7[%c0_14, %c0_15] : memref<1x96xf32, #tpu.memory_space<vmem>>, vector<1x96xf32>
    %15 = vector.broadcast %14 : vector<1x96xf32> to vector<40x96xf32>
    %16 = arith.addf %13, %15 : vector<40x96xf32>
    %cst_16 = arith.constant 0.000000e+00 : f32
    %17 = vector.broadcast %cst_16 : f32 to vector<40x96xf32>
    %18 = arith.maximumf %16, %17 : vector<40x96xf32>
    %c0_17 = arith.constant 0 : index
    %c0_18 = arith.constant 0 : index
    %19 = vector.load %arg8[%c0_17, %c0_18] : memref<96x80xf32, #tpu.memory_space<vmem>>, vector<96x80xf32>
    %cst_19 = arith.constant dense<0.000000e+00> : vector<40x80xf32>
    %20 = tpu.matmul %18, %19, %cst_19 {dimension_numbers = #tpu.dot_dimension_numbers<[1], [0], [0], [1], [0, 0, 1, 1], [], []>} : vector<40x96xf32>, vector<96x80xf32>, vector<40x80xf32> -> vector<40x80xf32>
    %c0_20 = arith.constant 0 : index
    %c0_21 = arith.constant 0 : index
    %21 = vector.load %arg9[%c0_20, %c0_21] : memref<1x80xf32, #tpu.memory_space<vmem>>, vector<1x80xf32>
    %22 = vector.broadcast %21 : vector<1x80xf32> to vector<40x80xf32>
    %23 = arith.addf %20, %22 : vector<40x80xf32>
    %cst_22 = arith.constant 0.000000e+00 : f32
    %24 = vector.broadcast %cst_22 : f32 to vector<40x80xf32>
    %25 = arith.maximumf %23, %24 : vector<40x80xf32>
    %c0_23 = arith.constant 0 : index
    %c0_24 = arith.constant 0 : index
    %26 = vector.load %arg10[%c0_23, %c0_24] : memref<80x64xf32, #tpu.memory_space<vmem>>, vector<80x64xf32>
    %cst_25 = arith.constant dense<0.000000e+00> : vector<40x64xf32>
    %27 = tpu.matmul %25, %26, %cst_25 {dimension_numbers = #tpu.dot_dimension_numbers<[1], [0], [0], [1], [0, 0, 1, 1], [], []>} : vector<40x80xf32>, vector<80x64xf32>, vector<40x64xf32> -> vector<40x64xf32>
    %c0_26 = arith.constant 0 : index
    %c0_27 = arith.constant 0 : index
    %28 = vector.load %arg11[%c0_26, %c0_27] : memref<1x64xf32, #tpu.memory_space<vmem>>, vector<1x64xf32>
    %29 = vector.broadcast %28 : vector<1x64xf32> to vector<40x64xf32>
    %30 = arith.addf %27, %29 : vector<40x64xf32>
    %cst_28 = arith.constant 0.000000e+00 : f32
    %31 = vector.broadcast %cst_28 : f32 to vector<40x64xf32>
    %32 = arith.maximumf %30, %31 : vector<40x64xf32>
    %c0_29 = arith.constant 0 : index
    %c0_30 = arith.constant 0 : index
    %33 = vector.load %arg13[%c0_29, %c0_30] : memref<1x28xf32, #tpu.memory_space<vmem>>, vector<1x28xf32>
    %34 = vector.extract_strided_slice %32 {offsets = [0, 0], sizes = [8, 64], strides = [1, 1]} : vector<40x64xf32> to vector<8x64xf32>
    %c0_31 = arith.constant 0 : index
    %c0_32 = arith.constant 0 : index
    %c0_33 = arith.constant 0 : index
    %35 = vector.load %arg12[%c0_31, %c0_32, %c0_33] : memref<5x64x28xf32, #tpu.memory_space<vmem>>, vector<1x64x28xf32>
    %36 = vector.shape_cast %35 : vector<1x64x28xf32> to vector<64x28xf32>
    %cst_34 = arith.constant dense<0.000000e+00> : vector<8x28xf32>
    %37 = tpu.matmul %34, %36, %cst_34 {dimension_numbers = #tpu.dot_dimension_numbers<[1], [0], [0], [1], [0, 0, 1, 1], [], []>} : vector<8x64xf32>, vector<64x28xf32>, vector<8x28xf32> -> vector<8x28xf32>
    %38 = vector.broadcast %33 : vector<1x28xf32> to vector<8x28xf32>
    %39 = arith.addf %38, %37 : vector<8x28xf32>
    %40 = vector.extract_strided_slice %32 {offsets = [8, 0], sizes = [8, 64], strides = [1, 1]} : vector<40x64xf32> to vector<8x64xf32>
    %c1 = arith.constant 1 : index
    %c0_35 = arith.constant 0 : index
    %c0_36 = arith.constant 0 : index
    %41 = vector.load %arg12[%c1, %c0_35, %c0_36] : memref<5x64x28xf32, #tpu.memory_space<vmem>>, vector<1x64x28xf32>
    %42 = vector.shape_cast %41 : vector<1x64x28xf32> to vector<64x28xf32>
    %cst_37 = arith.constant dense<0.000000e+00> : vector<8x28xf32>
    %43 = tpu.matmul %40, %42, %cst_37 {dimension_numbers = #tpu.dot_dimension_numbers<[1], [0], [0], [1], [0, 0, 1, 1], [], []>} : vector<8x64xf32>, vector<64x28xf32>, vector<8x28xf32> -> vector<8x28xf32>
    %44 = arith.addf %39, %43 : vector<8x28xf32>
    %45 = vector.extract_strided_slice %32 {offsets = [16, 0], sizes = [8, 64], strides = [1, 1]} : vector<40x64xf32> to vector<8x64xf32>
    %c2 = arith.constant 2 : index
    %c0_38 = arith.constant 0 : index
    %c0_39 = arith.constant 0 : index
    %46 = vector.load %arg12[%c2, %c0_38, %c0_39] : memref<5x64x28xf32, #tpu.memory_space<vmem>>, vector<1x64x28xf32>
    %47 = vector.shape_cast %46 : vector<1x64x28xf32> to vector<64x28xf32>
    %cst_40 = arith.constant dense<0.000000e+00> : vector<8x28xf32>
    %48 = tpu.matmul %45, %47, %cst_40 {dimension_numbers = #tpu.dot_dimension_numbers<[1], [0], [0], [1], [0, 0, 1, 1], [], []>} : vector<8x64xf32>, vector<64x28xf32>, vector<8x28xf32> -> vector<8x28xf32>
    %49 = arith.addf %44, %48 : vector<8x28xf32>
    %50 = vector.extract_strided_slice %32 {offsets = [24, 0], sizes = [8, 64], strides = [1, 1]} : vector<40x64xf32> to vector<8x64xf32>
    %c3 = arith.constant 3 : index
    %c0_41 = arith.constant 0 : index
    %c0_42 = arith.constant 0 : index
    %51 = vector.load %arg12[%c3, %c0_41, %c0_42] : memref<5x64x28xf32, #tpu.memory_space<vmem>>, vector<1x64x28xf32>
    %52 = vector.shape_cast %51 : vector<1x64x28xf32> to vector<64x28xf32>
    %cst_43 = arith.constant dense<0.000000e+00> : vector<8x28xf32>
    %53 = tpu.matmul %50, %52, %cst_43 {dimension_numbers = #tpu.dot_dimension_numbers<[1], [0], [0], [1], [0, 0, 1, 1], [], []>} : vector<8x64xf32>, vector<64x28xf32>, vector<8x28xf32> -> vector<8x28xf32>
    %54 = arith.addf %49, %53 : vector<8x28xf32>
    %55 = vector.extract_strided_slice %32 {offsets = [32, 0], sizes = [8, 64], strides = [1, 1]} : vector<40x64xf32> to vector<8x64xf32>
    %c4 = arith.constant 4 : index
    %c0_44 = arith.constant 0 : index
    %c0_45 = arith.constant 0 : index
    %56 = vector.load %arg12[%c4, %c0_44, %c0_45] : memref<5x64x28xf32, #tpu.memory_space<vmem>>, vector<1x64x28xf32>
    %57 = vector.shape_cast %56 : vector<1x64x28xf32> to vector<64x28xf32>
    %cst_46 = arith.constant dense<0.000000e+00> : vector<8x28xf32>
    %58 = tpu.matmul %55, %57, %cst_46 {dimension_numbers = #tpu.dot_dimension_numbers<[1], [0], [0], [1], [0, 0, 1, 1], [], []>} : vector<8x64xf32>, vector<64x28xf32>, vector<8x28xf32> -> vector<8x28xf32>
    %59 = arith.addf %54, %58 : vector<8x28xf32>
    %cst_47 = arith.constant 0.000000e+00 : f32
    %60 = vector.broadcast %cst_47 : f32 to vector<8x28xf32>
    %61 = arith.maximumf %59, %60 : vector<8x28xf32>
    %c0_48 = arith.constant 0 : index
    %c0_49 = arith.constant 0 : index
    %62 = vector.load %arg14[%c0_48, %c0_49] : memref<28x12xf32, #tpu.memory_space<vmem>>, vector<28x12xf32>
    %cst_50 = arith.constant dense<0.000000e+00> : vector<8x12xf32>
    %63 = tpu.matmul %61, %62, %cst_50 {dimension_numbers = #tpu.dot_dimension_numbers<[1], [0], [0], [1], [0, 0, 1, 1], [], []>} : vector<8x28xf32>, vector<28x12xf32>, vector<8x12xf32> -> vector<8x12xf32>
    %c0_51 = arith.constant 0 : index
    %c0_52 = arith.constant 0 : index
    %64 = vector.load %arg15[%c0_51, %c0_52] : memref<1x12xf32, #tpu.memory_space<vmem>>, vector<1x12xf32>
    %65 = vector.broadcast %64 : vector<1x12xf32> to vector<8x12xf32>
    %66 = arith.addf %63, %65 : vector<8x12xf32>
    %cst_53 = arith.constant 0.000000e+00 : f32
    %67 = vector.broadcast %cst_53 : f32 to vector<8x12xf32>
    %68 = arith.maximumf %66, %67 : vector<8x12xf32>
    %c0_54 = arith.constant 0 : index
    %c0_55 = arith.constant 0 : index
    %69 = vector.load %arg16[%c0_54, %c0_55] : memref<12x10xf32, #tpu.memory_space<vmem>>, vector<12x10xf32>
    %cst_56 = arith.constant dense<0.000000e+00> : vector<8x10xf32>
    %70 = tpu.matmul %68, %69, %cst_56 {dimension_numbers = #tpu.dot_dimension_numbers<[1], [0], [0], [1], [0, 0, 1, 1], [], []>} : vector<8x12xf32>, vector<12x10xf32>, vector<8x10xf32> -> vector<8x10xf32>
    %c0_57 = arith.constant 0 : index
    %c0_58 = arith.constant 0 : index
    %71 = vector.load %arg17[%c0_57, %c0_58] : memref<1x10xf32, #tpu.memory_space<vmem>>, vector<1x10xf32>
    %72 = vector.broadcast %71 : vector<1x10xf32> to vector<8x10xf32>
    %73 = arith.addf %70, %72 : vector<8x10xf32>
    %cst_59 = arith.constant 0.000000e+00 : f32
    %74 = vector.broadcast %cst_59 : f32 to vector<8x10xf32>
    %75 = arith.maximumf %73, %74 : vector<8x10xf32>
    %c0_60 = arith.constant 0 : index
    %c0_61 = arith.constant 0 : index
    %76 = vector.load %arg18[%c0_60, %c0_61] : memref<10x8xf32, #tpu.memory_space<vmem>>, vector<10x8xf32>
    %cst_62 = arith.constant dense<0.000000e+00> : vector<8x8xf32>
    %77 = tpu.matmul %75, %76, %cst_62 {dimension_numbers = #tpu.dot_dimension_numbers<[1], [0], [0], [1], [0, 0, 1, 1], [], []>} : vector<8x10xf32>, vector<10x8xf32>, vector<8x8xf32> -> vector<8x8xf32>
    %c0_63 = arith.constant 0 : index
    %c0_64 = arith.constant 0 : index
    %78 = vector.load %arg19[%c0_63, %c0_64] : memref<1x8xf32, #tpu.memory_space<vmem>>, vector<1x8xf32>
    %79 = vector.broadcast %78 : vector<1x8xf32> to vector<8x8xf32>
    %80 = arith.addf %77, %79 : vector<8x8xf32>
    %cst_65 = arith.constant 0.000000e+00 : f32
    %81 = vector.broadcast %cst_65 : f32 to vector<8x8xf32>
    %82 = arith.maximumf %80, %81 : vector<8x8xf32>
    %c0_66 = arith.constant 0 : index
    %c0_67 = arith.constant 0 : index
    %83 = vector.load %arg20[%c0_66, %c0_67] : memref<8x128xf32, #tpu.memory_space<vmem>>, vector<8x128xf32>
    %cst_68 = arith.constant dense<0.000000e+00> : vector<8x128xf32>
    %84 = tpu.matmul %82, %83, %cst_68 {dimension_numbers = #tpu.dot_dimension_numbers<[1], [0], [0], [1], [0, 0, 1, 1], [], []>} : vector<8x8xf32>, vector<8x128xf32>, vector<8x128xf32> -> vector<8x128xf32>
    %c0_69 = arith.constant 0 : index
    %c0_70 = arith.constant 0 : index
    %85 = vector.load %arg21[%c0_69, %c0_70] : memref<1x128xf32, #tpu.memory_space<vmem>>, vector<1x128xf32>
    %86 = vector.broadcast %85 : vector<1x128xf32> to vector<8x128xf32>
    %87 = arith.addf %84, %86 : vector<8x128xf32>
    %c0_71 = arith.constant 0 : index
    %c0_72 = arith.constant 0 : index
    %88 = vector.load %arg22[%c0_71, %c0_72] : memref<8x128xf32, #tpu.memory_space<vmem>>, vector<8x128xf32>
    tpu.vector_store %arg22[%c0_71, %c0_72], %87 {strides = array<i32>} : memref<8x128xf32, #tpu.memory_space<vmem>>, vector<8x128xf32>,
    return
  }
  func.func @transform_0(%arg0: i32) -> (i32, i32) {
    %c0_i32 = arith.constant 0 : i32
    %c0_i32_0 = arith.constant 0 : i32
    return %arg0, %c0_i32 : i32, i32
  }
  func.func @transform_1(%arg0: i32) -> (i32, i32) {
    %c0_i32 = arith.constant 0 : i32
    %c0_i32_0 = arith.constant 0 : i32
    %c0_i32_1 = arith.constant 0 : i32
    return %c0_i32, %c0_i32_0 : i32, i32
  }
  func.func @transform_2(%arg0: i32) -> (i32, i32) {
    %c0_i32 = arith.constant 0 : i32
    %c0_i32_0 = arith.constant 0 : i32
    %c0_i32_1 = arith.constant 0 : i32
    return %c0_i32, %c0_i32_0 : i32, i32
  }
  func.func @transform_3(%arg0: i32) -> (i32, i32) {
    %c0_i32 = arith.constant 0 : i32
    %c0_i32_0 = arith.constant 0 : i32
    %c0_i32_1 = arith.constant 0 : i32
    return %c0_i32, %c0_i32_0 : i32, i32
  }
  func.func @transform_4(%arg0: i32) -> (i32, i32) {
    %c0_i32 = arith.constant 0 : i32
    %c0_i32_0 = arith.constant 0 : i32
    %c0_i32_1 = arith.constant 0 : i32
    return %c0_i32, %c0_i32_0 : i32, i32
  }
  func.func @transform_5(%arg0: i32) -> (i32, i32) {
    %c0_i32 = arith.constant 0 : i32
    %c0_i32_0 = arith.constant 0 : i32
    %c0_i32_1 = arith.constant 0 : i32
    return %c0_i32, %c0_i32_0 : i32, i32
  }
  func.func @transform_6(%arg0: i32) -> (i32, i32) {
    %c0_i32 = arith.constant 0 : i32
    %c0_i32_0 = arith.constant 0 : i32
    %c0_i32_1 = arith.constant 0 : i32
    return %c0_i32, %c0_i32_0 : i32, i32
  }
  func.func @transform_7(%arg0: i32) -> (i32, i32) {
    %c0_i32 = arith.constant 0 : i32
    %c0_i32_0 = arith.constant 0 : i32
    %c0_i32_1 = arith.constant 0 : i32
    return %c0_i32, %c0_i32_0 : i32, i32
  }
  func.func @transform_8(%arg0: i32) -> (i32, i32) {
    %c0_i32 = arith.constant 0 : i32
    %c0_i32_0 = arith.constant 0 : i32
    %c0_i32_1 = arith.constant 0 : i32
    return %c0_i32, %c0_i32_0 : i32, i32
  }
  func.func @transform_9(%arg0: i32) -> (i32, i32) {
    %c0_i32 = arith.constant 0 : i32
    %c0_i32_0 = arith.constant 0 : i32
    %c0_i32_1 = arith.constant 0 : i32
    return %c0_i32, %c0_i32_0 : i32, i32
  }
  func.func @transform_10(%arg0: i32) -> (i32, i32) {
    %c0_i32 = arith.constant 0 : i32
    %c0_i32_0 = arith.constant 0 : i32
    %c0_i32_1 = arith.constant 0 : i32
    return %c0_i32, %c0_i32_0 : i32, i32
  }
  func.func @transform_11(%arg0: i32) -> (i32, i32, i32) {
    %c0_i32 = arith.constant 0 : i32
    %c0_i32_0 = arith.constant 0 : i32
    %c0_i32_1 = arith.constant 0 : i32
    %c0_i32_2 = arith.constant 0 : i32
    return %c0_i32, %c0_i32_0, %c0_i32_1 : i32, i32, i32
  }
  func.func @transform_12(%arg0: i32) -> (i32, i32) {
    %c0_i32 = arith.constant 0 : i32
    %c0_i32_0 = arith.constant 0 : i32
    %c0_i32_1 = arith.constant 0 : i32
    return %c0_i32, %c0_i32_0 : i32, i32
  }
  func.func @transform_13(%arg0: i32) -> (i32, i32) {
    %c0_i32 = arith.constant 0 : i32
    %c0_i32_0 = arith.constant 0 : i32
    %c0_i32_1 = arith.constant 0 : i32
    return %c0_i32, %c0_i32_0 : i32, i32
  }
  func.func @transform_14(%arg0: i32) -> (i32, i32) {
    %c0_i32 = arith.constant 0 : i32
    %c0_i32_0 = arith.constant 0 : i32
    %c0_i32_1 = arith.constant 0 : i32
    return %c0_i32, %c0_i32_0 : i32, i32
  }
  func.func @transform_15(%arg0: i32) -> (i32, i32) {
    %c0_i32 = arith.constant 0 : i32
    %c0_i32_0 = arith.constant 0 : i32
    %c0_i32_1 = arith.constant 0 : i32
    return %c0_i32, %c0_i32_0 : i32, i32
  }
  func.func @transform_16(%arg0: i32) -> (i32, i32) {
    %c0_i32 = arith.constant 0 : i32
    %c0_i32_0 = arith.constant 0 : i32
    %c0_i32_1 = arith.constant 0 : i32
    return %c0_i32, %c0_i32_0 : i32, i32
  }
  func.func @transform_17(%arg0: i32) -> (i32, i32) {
    %c0_i32 = arith.constant 0 : i32
    %c0_i32_0 = arith.constant 0 : i32
    %c0_i32_1 = arith.constant 0 : i32
    return %c0_i32, %c0_i32_0 : i32, i32
  }
  func.func @transform_18(%arg0: i32) -> (i32, i32) {
    %c0_i32 = arith.constant 0 : i32
    %c0_i32_0 = arith.constant 0 : i32
    %c0_i32_1 = arith.constant 0 : i32
    return %c0_i32, %c0_i32_0 : i32, i32
  }
  func.func @transform_19(%arg0: i32) -> (i32, i32) {
    %c0_i32 = arith.constant 0 : i32
    %c0_i32_0 = arith.constant 0 : i32
    %c0_i32_1 = arith.constant 0 : i32
    return %c0_i32, %c0_i32_0 : i32, i32
  }
  func.func @transform_20(%arg0: i32) -> (i32, i32) {
    %c0_i32 = arith.constant 0 : i32
    %c0_i32_0 = arith.constant 0 : i32
    %c0_i32_1 = arith.constant 0 : i32
    return %c0_i32, %c0_i32_0 : i32, i32
  }
  func.func @transform_21(%arg0: i32) -> (i32, i32) {
    %c0_i32 = arith.constant 0 : i32
    %c0_i32_0 = arith.constant 0 : i32
    return %arg0, %c0_i32 : i32, i32
  }
}

</mosaic_0001>

<llo_original>
// kernel: tit_forward.1
$region0: #{tit_forward.1}
  #allocation0 [shape = 'u32[]', space=smem, size = 0x4, offset = 0x4, fixed_abs, tag = 'smem constant byte address 0x4 - core index']
  #allocation1 [shape = 'u32[144,128]{1,0:T(1,128)}', space=vmem, size = 0x12000, scoped, tag = 'internal scratch']
  %s0 = inlined_call_operand.vmem [shape: f32[80,768], index: 0, kind: input, shape index: {}]
  %s1 = inlined_call_operand.vmem [shape: f32[40,32], index: 1, kind: input, shape index: {}]
  %s2 = inlined_call_operand.vmem [shape: f32[768,32], index: 2, kind: input, shape index: {}]
  %s3 = inlined_call_operand.vmem [shape: f32[32,56], index: 3, kind: input, shape index: {}]
  %s4 = inlined_call_operand.vmem [shape: f32[1,56], index: 4, kind: input, shape index: {}]
  %s5 = inlined_call_operand.vmem [shape: f32[56,96], index: 5, kind: input, shape index: {}]
  %s6 = inlined_call_operand.vmem [shape: f32[1,96], index: 6, kind: input, shape index: {}]
  %s7 = inlined_call_operand.vmem [shape: f32[96,80], index: 7, kind: input, shape index: {}]
  %s8 = inlined_call_operand.vmem [shape: f32[1,80], index: 8, kind: input, shape index: {}]
  %s9 = inlined_call_operand.vmem [shape: f32[80,64], index: 9, kind: input, shape index: {}]
  %s10 = inlined_call_operand.vmem [shape: f32[1,64], index: 10, kind: input, shape index: {}]
  %s11 = inlined_call_operand.vmem [shape: f32[5,64,28], index: 11, kind: input, shape index: {}]
  %s12 = inlined_call_operand.vmem [shape: f32[1,28], index: 12, kind: input, shape index: {}]
  %s13 = inlined_call_operand.vmem [shape: f32[28,12], index: 13, kind: input, shape index: {}]
  %s14 = inlined_call_operand.vmem [shape: f32[1,12], index: 14, kind: input, shape index: {}]
  %s15 = inlined_call_operand.vmem [shape: f32[12,10], index: 15, kind: input, shape index: {}]
  %s16 = inlined_call_operand.vmem [shape: f32[1,10], index: 16, kind: input, shape index: {}]
  %s17 = inlined_call_operand.vmem [shape: f32[10,8], index: 17, kind: input, shape index: {}]
  %s18 = inlined_call_operand.vmem [shape: f32[1,8], index: 18, kind: input, shape index: {}]
  %s19 = inlined_call_operand.vmem [shape: f32[8,128], index: 19, kind: input, shape index: {}]
  %s20 = inlined_call_operand.vmem [shape: f32[1,128], index: 20, kind: input, shape index: {}]
  %s21 = inlined_call_operand.vmem [shape: f32[16,128], index: 21, kind: output, shape index: {}]
  %s22 = sld [smem:[#allocation0]]
  $region117: #{tit_forward.1} parent=0
    _
  %s24 = ssub.s32 1, %s22
  %s25 = scalar_select 0, %s24, %s22
  loop: start=0, step=1, limit=4
  $region2: #{tit_forward.1} parent=0 // loop_pre_header
    _
  $region3: #{tit_forward.1} parent=0 // loop_header
    %s27 = sphi 0, %s31
    %p28 = scmp.ge.s32.totalorder %s27, 4
    %s37 = sphi 0, %s39
    %s40 = sphi 0, %s37
    %s41 = sphi 0, %s40
    %s57 = sphi 0, %s41
    %s61 = sphi 0, %s61
    %s63 = sphi 0, %s61
    %s64 = sphi 0, %s63
    %s78 = sphi 0, %s64
    %s82 = sphi 0, %s82
    %s84 = sphi 0, %s82
    %s85 = sphi 0, %s84
    %s99 = sphi 0, %s85
    %s103 = sphi 0, %s103
    %s105 = sphi 0, %s103
    %s106 = sphi 0, %s105
    %s120 = sphi 0, %s106
    %s124 = sphi 0, %s124
    %s126 = sphi 0, %s124
    %s127 = sphi 0, %s126
    %s141 = sphi 0, %s127
    %s145 = sphi 0, %s145
    %s147 = sphi 0, %s145
    %s148 = sphi 0, %s147
    %s162 = sphi 0, %s148
    %s166 = sphi 0, %s166
    %s168 = sphi 0, %s166
    %s169 = sphi 0, %s168
    %s183 = sphi 0, %s169
    %s187 = sphi 0, %s187
    %s189 = sphi 0, %s187
    %s190 = sphi 0, %s189
    %s204 = sphi 0, %s190
    %s208 = sphi 0, %s208
    %s210 = sphi 0, %s208
    %s211 = sphi 0, %s210
    %s225 = sphi 0, %s211
    %s229 = sphi 0, %s229
    %s231 = sphi 0, %s229
    %s232 = sphi 0, %s231
    %s246 = sphi 0, %s232
    %s250 = sphi 0, %s250
    %s252 = sphi 0, %s250
    %s253 = sphi 0, %s252
    %s267 = sphi 0, %s253
    %s271 = sphi 0, %s271
    %s273 = sphi 0, %s271
    %s274 = sphi 0, %s273
    %s288 = sphi 0, %s274
    %s292 = sphi 0, %s292
    %s294 = sphi 0, %s292
    %s295 = sphi 0, %s294
    %s309 = sphi 0, %s295
    %s313 = sphi 0, %s313
    %s315 = sphi 0, %s313
    %s316 = sphi 0, %s315
    %s330 = sphi 0, %s316
    %s334 = sphi 0, %s334
    %s336 = sphi 0, %s334
    %s337 = sphi 0, %s336
    %s351 = sphi 0, %s337
    %s355 = sphi 0, %s355
    %s357 = sphi 0, %s355
    %s358 = sphi 0, %s357
    %s372 = sphi 0, %s358
    %s376 = sphi 0, %s376
    %s378 = sphi 0, %s376
    %s379 = sphi 0, %s378
    %s393 = sphi 0, %s379
    %s397 = sphi 0, %s397
    %s399 = sphi 0, %s397
    %s400 = sphi 0, %s399
    %s414 = sphi 0, %s400
    %s418 = sphi 0, %s418
    %s420 = sphi 0, %s418
    %s421 = sphi 0, %s420
    %s435 = sphi 0, %s421
    %s439 = sphi 0, %s439
    %s441 = sphi 0, %s439
    %s442 = sphi 0, %s441
    %s456 = sphi 0, %s442
    %s460 = sphi 0, %s460
    %s462 = sphi 0, %s460
    %s463 = sphi 0, %s462
    %s477 = sphi 0, %s463
    %s483 = sphi 0, %s485
    %s486 = sphi 0, %s483
    %s487 = sphi 0, %s486
    %s503 = sphi 0, %s487
  $region4: #{tit_forward.1} parent=0 // loop_header_branch
    %30 = sbr.rel (%p28) target = $region8
  $region5: #{tit_forward.1} parent=0 // loop_body
    %s32 = ssub.s32 %s27, 1
    %s33 = ssub.s32 %s27, 2
    %s34 = sadd.s32 %s27, 1
    %s35 = ssub.s32 %s27, %s34
    %p36 = scmp.eq.s32.totalorder %s35, 0
    %s38 = sadd.s32 %s37, 1
    %s39 = scalar_select %p36, %s37, %s38
    %p42 = pneg %p36
    %p43 = scmp.eq.s32.totalorder %s27, 1
    %p44 = por %p42, %p43
    %p45 = scmp.ne.s32.totalorder %s37, %s40
    %p46 = scmp.eq.s32.totalorder %s27, 0
    %p47 = por %p45, %p46
    %p48 = scmp.ne.s32.totalorder %s37, %s40
    %p49 = scmp.eq.s32.totalorder %s32, 1
    %p50 = por %p48, %p49
    %p51 = scmp.ne.s32.totalorder %s40, %s41
    %p52 = scmp.eq.s32.totalorder %s32, 0
    %p53 = por %p51, %p52
    %p54 = scmp.ne.s32.totalorder %s40, %s41
    %p55 = scmp.eq.s32.totalorder %s33, 1
    %p56 = por %p54, %p55
    %p58 = scmp.ne.s32.totalorder %s41, %s57
    %p59 = scmp.eq.s32.totalorder %s33, 0
    %p60 = por %p58, %p59
    %s62 = sadd.s32 %s61, 1
    %p65 = scmp.eq.s32.totalorder %s27, 1
    %p66 = scmp.ne.s32.totalorder %s61, %s63
    %p67 = scmp.eq.s32.totalorder %s27, 0
    %p68 = por %p66, %p67
    %p69 = scmp.ne.s32.totalorder %s61, %s63
    %p70 = scmp.eq.s32.totalorder %s32, 1
    %p71 = por %p69, %p70
    %p72 = scmp.ne.s32.totalorder %s63, %s64
    %p73 = scmp.eq.s32.totalorder %s32, 0
    %p74 = por %p72, %p73
    %p75 = scmp.ne.s32.totalorder %s63, %s64
    %p76 = scmp.eq.s32.totalorder %s33, 1
    %p77 = por %p75, %p76
    %p79 = scmp.ne.s32.totalorder %s64, %s78
    %p80 = scmp.eq.s32.totalorder %s33, 0
    %p81 = por %p79, %p80
    %s83 = sadd.s32 %s82, 1
    %p86 = scmp.eq.s32.totalorder %s27, 1
    %p87 = scmp.ne.s32.totalorder %s82, %s84
    %p88 = scmp.eq.s32.totalorder %s27, 0
    %p89 = por %p87, %p88
    %p90 = scmp.ne.s32.totalorder %s82, %s84
    %p91 = scmp.eq.s32.totalorder %s32, 1
    %p92 = por %p90, %p91
    %p93 = scmp.ne.s32.totalorder %s84, %s85
    %p94 = scmp.eq.s32.totalorder %s32, 0
    %p95 = por %p93, %p94
    %p96 = scmp.ne.s32.totalorder %s84, %s85
    %p97 = scmp.eq.s32.totalorder %s33, 1
    %p98 = por %p96, %p97
    %p100 = scmp.ne.s32.totalorder %s85, %s99
    %p101 = scmp.eq.s32.totalorder %s33, 0
    %p102 = por %p100, %p101
    %s104 = sadd.s32 %s103, 1
    %p107 = scmp.eq.s32.totalorder %s27, 1
    %p108 = scmp.ne.s32.totalorder %s103, %s105
    %p109 = scmp.eq.s32.totalorder %s27, 0
    %p110 = por %p108, %p109
    %p111 = scmp.ne.s32.totalorder %s103, %s105
    %p112 = scmp.eq.s32.totalorder %s32, 1
    %p113 = por %p111, %p112
    %p114 = scmp.ne.s32.totalorder %s105, %s106
    %p115 = scmp.eq.s32.totalorder %s32, 0
    %p116 = por %p114, %p115
    %p117 = scmp.ne.s32.totalorder %s105, %s106
    %p118 = scmp.eq.s32.totalorder %s33, 1
    %p119 = por %p117, %p118
    %p121 = scmp.ne.s32.totalorder %s106, %s120
    %p122 = scmp.eq.s32.totalorder %s33, 0
    %p123 = por %p121, %p122
    %s125 = sadd.s32 %s124, 1
    %p128 = scmp.eq.s32.totalorder %s27, 1
    %p129 = scmp.ne.s32.totalorder %s124, %s126
    %p130 = scmp.eq.s32.totalorder %s27, 0
    %p131 = por %p129, %p130
    %p132 = scmp.ne.s32.totalorder %s124, %s126
    %p133 = scmp.eq.s32.totalorder %s32, 1
    %p134 = por %p132, %p133
    %p135 = scmp.ne.s32.totalorder %s126, %s127
    %p136 = scmp.eq.s32.totalorder %s32, 0
    %p137 = por %p135, %p136
    %p138 = scmp.ne.s32.totalorder %s126, %s127
    %p139 = scmp.eq.s32.totalorder %s33, 1
    %p140 = por %p138, %p139
    %p142 = scmp.ne.s32.totalorder %s127, %s141
    %p143 = scmp.eq.s32.totalorder %s33, 0
    %p144 = por %p142, %p143
    %s146 = sadd.s32 %s145, 1
    %p149 = scmp.eq.s32.totalorder %s27, 1
    %p150 = scmp.ne.s32.totalorder %s145, %s147
    %p151 = scmp.eq.s32.totalorder %s27, 0
    %p152 = por %p150, %p151
    %p153 = scmp.ne.s32.totalorder %s145, %s147
    %p154 = scmp.eq.s32.totalorder %s32, 1
    %p155 = por %p153, %p154
    %p156 = scmp.ne.s32.totalorder %s147, %s148
    %p157 = scmp.eq.s32.totalorder %s32, 0
    %p158 = por %p156, %p157
    %p159 = scmp.ne.s32.totalorder %s147, %s148
    %p160 = scmp.eq.s32.totalorder %s33, 1
    %p161 = por %p159, %p160
    %p163 = scmp.ne.s32.totalorder %s148, %s162
    %p164 = scmp.eq.s32.totalorder %s33, 0
    %p165 = por %p163, %p164
    %s167 = sadd.s32 %s166, 1
    %p170 = scmp.eq.s32.totalorder %s27, 1
    %p171 = scmp.ne.s32.totalorder %s166, %s168
    %p172 = scmp.eq.s32.totalorder %s27, 0
    %p173 = por %p171, %p172
    %p174 = scmp.ne.s32.totalorder %s166, %s168
    %p175 = scmp.eq.s32.totalorder %s32, 1
    %p176 = por %p174, %p175
    %p177 = scmp.ne.s32.totalorder %s168, %s169
    %p178 = scmp.eq.s32.totalorder %s32, 0
    %p179 = por %p177, %p178
    %p180 = scmp.ne.s32.totalorder %s168, %s169
    %p181 = scmp.eq.s32.totalorder %s33, 1
    %p182 = por %p180, %p181
    %p184 = scmp.ne.s32.totalorder %s169, %s183
    %p185 = scmp.eq.s32.totalorder %s33, 0
    %p186 = por %p184, %p185
    %s188 = sadd.s32 %s187, 1
    %p191 = scmp.eq.s32.totalorder %s27, 1
    %p192 = scmp.ne.s32.totalorder %s187, %s189
    %p193 = scmp.eq.s32.totalorder %s27, 0
    %p194 = por %p192, %p193
    %p195 = scmp.ne.s32.totalorder %s187, %s189
    %p196 = scmp.eq.s32.totalorder %s32, 1
    %p197 = por %p195, %p196
    %p198 = scmp.ne.s32.totalorder %s189, %s190
    %p199 = scmp.eq.s32.totalorder %s32, 0
    %p200 = por %p198, %p199
    %p201 = scmp.ne.s32.totalorder %s189, %s190
    %p202 = scmp.eq.s32.totalorder %s33, 1
    %p203 = por %p201, %p202
    %p205 = scmp.ne.s32.totalorder %s190, %s204
    %p206 = scmp.eq.s32.totalorder %s33, 0
    %p207 = por %p205, %p206
    %s209 = sadd.s32 %s208, 1
    %p212 = scmp.eq.s32.totalorder %s27, 1
    %p213 = scmp.ne.s32.totalorder %s208, %s210
    %p214 = scmp.eq.s32.totalorder %s27, 0
    %p215 = por %p213, %p214
    %p216 = scmp.ne.s32.totalorder %s208, %s210
    %p217 = scmp.eq.s32.totalorder %s32, 1
    %p218 = por %p216, %p217
    %p219 = scmp.ne.s32.totalorder %s210, %s211
    %p220 = scmp.eq.s32.totalorder %s32, 0
    %p221 = por %p219, %p220
    %p222 = scmp.ne.s32.totalorder %s210, %s211
    %p223 = scmp.eq.s32.totalorder %s33, 1
    %p224 = por %p222, %p223
    %p226 = scmp.ne.s32.totalorder %s211, %s225
    %p227 = scmp.eq.s32.totalorder %s33, 0
    %p228 = por %p226, %p227
    %s230 = sadd.s32 %s229, 1
    %p233 = scmp.eq.s32.totalorder %s27, 1
    %p234 = scmp.ne.s32.totalorder %s229, %s231
    %p235 = scmp.eq.s32.totalorder %s27, 0
    %p236 = por %p234, %p235
    %p237 = scmp.ne.s32.totalorder %s229, %s231
    %p238 = scmp.eq.s32.totalorder %s32, 1
    %p239 = por %p237, %p238
    %p240 = scmp.ne.s32.totalorder %s231, %s232
    %p241 = scmp.eq.s32.totalorder %s32, 0
    %p242 = por %p240, %p241
    %p243 = scmp.ne.s32.totalorder %s231, %s232
    %p244 = scmp.eq.s32.totalorder %s33, 1
    %p245 = por %p243, %p244
    %p247 = scmp.ne.s32.totalorder %s232, %s246
    %p248 = scmp.eq.s32.totalorder %s33, 0
    %p249 = por %p247, %p248
    %s251 = sadd.s32 %s250, 1
    %p254 = scmp.eq.s32.totalorder %s27, 1
    %p255 = scmp.ne.s32.totalorder %s250, %s252
    %p256 = scmp.eq.s32.totalorder %s27, 0
    %p257 = por %p255, %p256
    %p258 = scmp.ne.s32.totalorder %s250, %s252
    %p259 = scmp.eq.s32.totalorder %s32, 1
    %p260 = por %p258, %p259
    %p261 = scmp.ne.s32.totalorder %s252, %s253
    %p262 = scmp.eq.s32.totalorder %s32, 0
    %p263 = por %p261, %p262
    %p264 = scmp.ne.s32.totalorder %s252, %s253
    %p265 = scmp.eq.s32.totalorder %s33, 1
    %p266 = por %p264, %p265
    %p268 = scmp.ne.s32.totalorder %s253, %s267
    %p269 = scmp.eq.s32.totalorder %s33, 0
    %p270 = por %p268, %p269
    %s272 = sadd.s32 %s271, 1
    %p275 = scmp.eq.s32.totalorder %s27, 1
    %p276 = scmp.ne.s32.totalorder %s271, %s273
    %p277 = scmp.eq.s32.totalorder %s27, 0
    %p278 = por %p276, %p277
    %p279 = scmp.ne.s32.totalorder %s271, %s273
    %p280 = scmp.eq.s32.totalorder %s32, 1
    %p281 = por %p279, %p280
    %p282 = scmp.ne.s32.totalorder %s273, %s274
    %p283 = scmp.eq.s32.totalorder %s32, 0
    %p284 = por %p282, %p283
    %p285 = scmp.ne.s32.totalorder %s273, %s274
    %p286 = scmp.eq.s32.totalorder %s33, 1
    %p287 = por %p285, %p286
    %p289 = scmp.ne.s32.totalorder %s274, %s288
    %p290 = scmp.eq.s32.totalorder %s33, 0
    %p291 = por %p289, %p290
    %s293 = sadd.s32 %s292, 1
    %p296 = scmp.eq.s32.totalorder %s27, 1
    %p297 = scmp.ne.s32.totalorder %s292, %s294
    %p298 = scmp.eq.s32.totalorder %s27, 0
    %p299 = por %p297, %p298
    %p300 = scmp.ne.s32.totalorder %s292, %s294
    %p301 = scmp.eq.s32.totalorder %s32, 1
    %p302 = por %p300, %p301
    %p303 = scmp.ne.s32.totalorder %s294, %s295
    %p304 = scmp.eq.s32.totalorder %s32, 0
    %p305 = por %p303, %p304
    %p306 = scmp.ne.s32.totalorder %s294, %s295
    %p307 = scmp.eq.s32.totalorder %s33, 1
    %p308 = por %p306, %p307
    %p310 = scmp.ne.s32.totalorder %s295, %s309
    %p311 = scmp.eq.s32.totalorder %s33, 0
    %p312 = por %p310, %p311
    %s314 = sadd.s32 %s313, 1
    %p317 = scmp.eq.s32.totalorder %s27, 1
    %p318 = scmp.ne.s32.totalorder %s313, %s315
    %p319 = scmp.eq.s32.totalorder %s27, 0
    %p320 = por %p318, %p319
    %p321 = scmp.ne.s32.totalorder %s313, %s315
    %p322 = scmp.eq.s32.totalorder %s32, 1
    %p323 = por %p321, %p322
    %p324 = scmp.ne.s32.totalorder %s315, %s316
    %p325 = scmp.eq.s32.totalorder %s32, 0
    %p326 = por %p324, %p325
    %p327 = scmp.ne.s32.totalorder %s315, %s316
    %p328 = scmp.eq.s32.totalorder %s33, 1
    %p329 = por %p327, %p328
    %p331 = scmp.ne.s32.totalorder %s316, %s330
    %p332 = scmp.eq.s32.totalorder %s33, 0
    %p333 = por %p331, %p332
    %s335 = sadd.s32 %s334, 1
    %p338 = scmp.eq.s32.totalorder %s27, 1
    %p339 = scmp.ne.s32.totalorder %s334, %s336
    %p340 = scmp.eq.s32.totalorder %s27, 0
    %p341 = por %p339, %p340
    %p342 = scmp.ne.s32.totalorder %s334, %s336
    %p343 = scmp.eq.s32.totalorder %s32, 1
    %p344 = por %p342, %p343
    %p345 = scmp.ne.s32.totalorder %s336, %s337
    %p346 = scmp.eq.s32.totalorder %s32, 0
    %p347 = por %p345, %p346
    %p348 = scmp.ne.s32.totalorder %s336, %s337
    %p349 = scmp.eq.s32.totalorder %s33, 1
    %p350 = por %p348, %p349
    %p352 = scmp.ne.s32.totalorder %s337, %s351
    %p353 = scmp.eq.s32.totalorder %s33, 0
    %p354 = por %p352, %p353
    %s356 = sadd.s32 %s355, 1
    %p359 = scmp.eq.s32.totalorder %s27, 1
    %p360 = scmp.ne.s32.totalorder %s355, %s357
    %p361 = scmp.eq.s32.totalorder %s27, 0
    %p362 = por %p360, %p361
    %p363 = scmp.ne.s32.totalorder %s355, %s357
    %p364 = scmp.eq.s32.totalorder %s32, 1
    %p365 = por %p363, %p364
    %p366 = scmp.ne.s32.totalorder %s357, %s358
    %p367 = scmp.eq.s32.totalorder %s32, 0
    %p368 = por %p366, %p367
    %p369 = scmp.ne.s32.totalorder %s357, %s358
    %p370 = scmp.eq.s32.totalorder %s33, 1
    %p371 = por %p369, %p370
    %p373 = scmp.ne.s32.totalorder %s358, %s372
    %p374 = scmp.eq.s32.totalorder %s33, 0
    %p375 = por %p373, %p374
    %s377 = sadd.s32 %s376, 1
    %p380 = scmp.eq.s32.totalorder %s27, 1
    %p381 = scmp.ne.s32.totalorder %s376, %s378
    %p382 = scmp.eq.s32.totalorder %s27, 0
    %p383 = por %p381, %p382
    %p384 = scmp.ne.s32.totalorder %s376, %s378
    %p385 = scmp.eq.s32.totalorder %s32, 1
    %p386 = por %p384, %p385
    %p387 = scmp.ne.s32.totalorder %s378, %s379
    %p388 = scmp.eq.s32.totalorder %s32, 0
    %p389 = por %p387, %p388
    %p390 = scmp.ne.s32.totalorder %s378, %s379
    %p391 = scmp.eq.s32.totalorder %s33, 1
    %p392 = por %p390, %p391
    %p394 = scmp.ne.s32.totalorder %s379, %s393
    %p395 = scmp.eq.s32.totalorder %s33, 0
    %p396 = por %p394, %p395
    %s398 = sadd.s32 %s397, 1
    %p401 = scmp.eq.s32.totalorder %s27, 1
    %p402 = scmp.ne.s32.totalorder %s397, %s399
    %p403 = scmp.eq.s32.totalorder %s27, 0
    %p404 = por %p402, %p403
    %p405 = scmp.ne.s32.totalorder %s397, %s399
    %p406 = scmp.eq.s32.totalorder %s32, 1
    %p407 = por %p405, %p406
    %p408 = scmp.ne.s32.totalorder %s399, %s400
    %p409 = scmp.eq.s32.totalorder %s32, 0
    %p410 = por %p408, %p409
    %p411 = scmp.ne.s32.totalorder %s399, %s400
    %p412 = scmp.eq.s32.totalorder %s33, 1
    %p413 = por %p411, %p412
    %p415 = scmp.ne.s32.totalorder %s400, %s414
    %p416 = scmp.eq.s32.totalorder %s33, 0
    %p417 = por %p415, %p416
    %s419 = sadd.s32 %s418, 1
    %p422 = scmp.eq.s32.totalorder %s27, 1
    %p423 = scmp.ne.s32.totalorder %s418, %s420
    %p424 = scmp.eq.s32.totalorder %s27, 0
    %p425 = por %p423, %p424
    %p426 = scmp.ne.s32.totalorder %s418, %s420
    %p427 = scmp.eq.s32.totalorder %s32, 1
    %p428 = por %p426, %p427
    %p429 = scmp.ne.s32.totalorder %s420, %s421
    %p430 = scmp.eq.s32.totalorder %s32, 0
    %p431 = por %p429, %p430
    %p432 = scmp.ne.s32.totalorder %s420, %s421
    %p433 = scmp.eq.s32.totalorder %s33, 1
    %p434 = por %p432, %p433
    %p436 = scmp.ne.s32.totalorder %s421, %s435
    %p437 = scmp.eq.s32.totalorder %s33, 0
    %p438 = por %p436, %p437
    %s440 = sadd.s32 %s439, 1
    %p443 = scmp.eq.s32.totalorder %s27, 1
    %p444 = scmp.ne.s32.totalorder %s439, %s441
    %p445 = scmp.eq.s32.totalorder %s27, 0
    %p446 = por %p444, %p445
    %p447 = scmp.ne.s32.totalorder %s439, %s441
    %p448 = scmp.eq.s32.totalorder %s32, 1
    %p449 = por %p447, %p448
    %p450 = scmp.ne.s32.totalorder %s441, %s442
    %p451 = scmp.eq.s32.totalorder %s32, 0
    %p452 = por %p450, %p451
    %p453 = scmp.ne.s32.totalorder %s441, %s442
    %p454 = scmp.eq.s32.totalorder %s33, 1
    %p455 = por %p453, %p454
    %p457 = scmp.ne.s32.totalorder %s442, %s456
    %p458 = scmp.eq.s32.totalorder %s33, 0
    %p459 = por %p457, %p458
    %s461 = sadd.s32 %s460, 1
    %p464 = scmp.eq.s32.totalorder %s27, 1
    %p465 = scmp.ne.s32.totalorder %s460, %s462
    %p466 = scmp.eq.s32.totalorder %s27, 0
    %p467 = por %p465, %p466
    %p468 = scmp.ne.s32.totalorder %s460, %s462
    %p469 = scmp.eq.s32.totalorder %s32, 1
    %p470 = por %p468, %p469
    %p471 = scmp.ne.s32.totalorder %s462, %s463
    %p472 = scmp.eq.s32.totalorder %s32, 0
    %p473 = por %p471, %p472
    %p474 = scmp.ne.s32.totalorder %s462, %s463
    %p475 = scmp.eq.s32.totalorder %s33, 1
    %p476 = por %p474, %p475
    %p478 = scmp.ne.s32.totalorder %s463, %s477
    %p479 = scmp.eq.s32.totalorder %s33, 0
    %p480 = por %p478, %p479
    %s481 = ssub.s32 %s27, %s34
    %p482 = scmp.eq.s32.totalorder %s481, 0
    %s484 = sadd.s32 %s483, 1
    %s485 = scalar_select %p482, %s483, %s484
    %p488 = pneg %p482
    %p489 = scmp.eq.s32.totalorder %s27, 1
    %p490 = por %p488, %p489
    %p491 = scmp.ne.s32.totalorder %s483, %s486
    %p492 = scmp.eq.s32.totalorder %s27, 0
    %p493 = por %p491, %p492
    %p494 = scmp.ne.s32.totalorder %s483, %s486
    %p495 = scmp.eq.s32.totalorder %s32, 1
    %p496 = por %p494, %p495
    %p497 = scmp.ne.s32.totalorder %s486, %s487
    %p498 = scmp.eq.s32.totalorder %s32, 0
    %p499 = por %p497, %p498
    %p500 = scmp.ne.s32.totalorder %s486, %s487
    %p501 = scmp.eq.s32.totalorder %s33, 1
    %p502 = por %p500, %p501
    %p504 = scmp.ne.s32.totalorder %s487, %s503
    %p505 = scmp.eq.s32.totalorder %s33, 0
    %p506 = por %p504, %p505
    %p507 = scmp.le.s32.totalorder 1, %s27
    %p508 = scmp.lt.s32.totalorder %s27, 3
    %p509 = pnand %p507, %p508
    %p510 = pneg %p509
    // Predicated region
    $region9: #{tit_forward.1} parent=5 // pred_check
      _
    $region10: #{tit_forward.1} parent=5 // pred_check_branch
      %512 = sbr.rel (%p509) target = $region12
    $region11: #{tit_forward.1} parent=5 // pred_region
      %s513 = ssub.s32 %s27, 1
      // Predicated region
      $region13: #{tit_forward.1} parent=11 // pred_check
        %p514 = pneg %p74
      $region14: #{tit_forward.1} parent=11 // pred_check_branch
        %516 = sbr.rel (%p514) target = $region16
      $region15: #{tit_forward.1} parent=11 // pred_region
        _
      $region16: #{tit_forward.1} parent=11 // pred_fallthru
        _
      // Predicated region
      $region17: #{tit_forward.1} parent=11 // pred_check
        %p517 = pneg %p95
      $region18: #{tit_forward.1} parent=11 // pred_check_branch
        %519 = sbr.rel (%p517) target = $region20
      $region19: #{tit_forward.1} parent=11 // pred_region
        _
      $region20: #{tit_forward.1} parent=11 // pred_fallthru
        _
      // Predicated region
      $region21: #{tit_forward.1} parent=11 // pred_check
        %p520 = pneg %p116
      $region22: #{tit_forward.1} parent=11 // pred_check_branch
        %522 = sbr.rel (%p520) target = $region24
      $region23: #{tit_forward.1} parent=11 // pred_region
        _
      $region24: #{tit_forward.1} parent=11 // pred_fallthru
        _
      // Predicated region
      $region25: #{tit_forward.1} parent=11 // pred_check
        %p523 = pneg %p137
      $region26: #{tit_forward.1} parent=11 // pred_check_branch
        %525 = sbr.rel (%p523) target = $region28
      $region27: #{tit_forward.1} parent=11 // pred_region
        _
      $region28: #{tit_forward.1} parent=11 // pred_fallthru
        _
      // Predicated region
      $region29: #{tit_forward.1} parent=11 // pred_check
        %p526 = pneg %p158
      $region30: #{tit_forward.1} parent=11 // pred_check_branch
        %528 = sbr.rel (%p526) target = $region32
      $region31: #{tit_forward.1} parent=11 // pred_region
        _
      $region32: #{tit_forward.1} parent=11 // pred_fallthru
        _
      // Predicated region
      $region33: #{tit_forward.1} parent=11 // pred_check
        %p529 = pneg %p179
      $region34: #{tit_forward.1} parent=11 // pred_check_branch
        %531 = sbr.rel (%p529) target = $region36
      $region35: #{tit_forward.1} parent=11 // pred_region
        _
      $region36: #{tit_forward.1} parent=11 // pred_fallthru
        _
      // Predicated region
      $region37: #{tit_forward.1} parent=11 // pred_check
        %p532 = pneg %p200
      $region38: #{tit_forward.1} parent=11 // pred_check_branch
        %534 = sbr.rel (%p532) target = $region40
      $region39: #{tit_forward.1} parent=11 // pred_region
        _
      $region40: #{tit_forward.1} parent=11 // pred_fallthru
        _
      // Predicated region
      $region41: #{tit_forward.1} parent=11 // pred_check
        %p535 = pneg %p221
      $region42: #{tit_forward.1} parent=11 // pred_check_branch
        %537 = sbr.rel (%p535) target = $region44
      $region43: #{tit_forward.1} parent=11 // pred_region
        _
      $region44: #{tit_forward.1} parent=11 // pred_fallthru
        _
      // Predicated region
      $region45: #{tit_forward.1} parent=11 // pred_check
        %p538 = pneg %p242
      $region46: #{tit_forward.1} parent=11 // pred_check_branch
        %540 = sbr.rel (%p538) target = $region48
      $region47: #{tit_forward.1} parent=11 // pred_region
        _
      $region48: #{tit_forward.1} parent=11 // pred_fallthru
        _
      // Predicated region
      $region49: #{tit_forward.1} parent=11 // pred_check
        %p541 = pneg %p263
      $region50: #{tit_forward.1} parent=11 // pred_check_branch
        %543 = sbr.rel (%p541) target = $region52
      $region51: #{tit_forward.1} parent=11 // pred_region
        _
      $region52: #{tit_forward.1} parent=11 // pred_fallthru
        _
      // Predicated region
      $region53: #{tit_forward.1} parent=11 // pred_check
        %p544 = pneg %p284
      $region54: #{tit_forward.1} parent=11 // pred_check_branch
        %546 = sbr.rel (%p544) target = $region56
      $region55: #{tit_forward.1} parent=11 // pred_region
        _
      $region56: #{tit_forward.1} parent=11 // pred_fallthru
        _
      // Predicated region
      $region57: #{tit_forward.1} parent=11 // pred_check
        %p547 = pneg %p305
      $region58: #{tit_forward.1} parent=11 // pred_check_branch
        %549 = sbr.rel (%p547) target = $region60
      $region59: #{tit_forward.1} parent=11 // pred_region
        _
      $region60: #{tit_forward.1} parent=11 // pred_fallthru
        _
      // Predicated region
      $region61: #{tit_forward.1} parent=11 // pred_check
        %p550 = pneg %p326
      $region62: #{tit_forward.1} parent=11 // pred_check_branch
        %552 = sbr.rel (%p550) target = $region64
      $region63: #{tit_forward.1} parent=11 // pred_region
        _
      $region64: #{tit_forward.1} parent=11 // pred_fallthru
        _
      // Predicated region
      $region65: #{tit_forward.1} parent=11 // pred_check
        %p553 = pneg %p347
      $region66: #{tit_forward.1} parent=11 // pred_check_branch
        %555 = sbr.rel (%p553) target = $region68
      $region67: #{tit_forward.1} parent=11 // pred_region
        _
      $region68: #{tit_forward.1} parent=11 // pred_fallthru
        _
      // Predicated region
      $region69: #{tit_forward.1} parent=11 // pred_check
        %p556 = pneg %p368
      $region70: #{tit_forward.1} parent=11 // pred_check_branch
        %558 = sbr.rel (%p556) target = $region72
      $region71: #{tit_forward.1} parent=11 // pred_region
        _
      $region72: #{tit_forward.1} parent=11 // pred_fallthru
        _
      // Predicated region
      $region73: #{tit_forward.1} parent=11 // pred_check
        %p559 = pneg %p389
      $region74: #{tit_forward.1} parent=11 // pred_check_branch
        %561 = sbr.rel (%p559) target = $region76
      $region75: #{tit_forward.1} parent=11 // pred_region
        _
      $region76: #{tit_forward.1} parent=11 // pred_fallthru
        _
      // Predicated region
      $region77: #{tit_forward.1} parent=11 // pred_check
        %p562 = pneg %p410
      $region78: #{tit_forward.1} parent=11 // pred_check_branch
        %564 = sbr.rel (%p562) target = $region80
      $region79: #{tit_forward.1} parent=11 // pred_region
        _
      $region80: #{tit_forward.1} parent=11 // pred_fallthru
        _
      // Predicated region
      $region81: #{tit_forward.1} parent=11 // pred_check
        %p565 = pneg %p431
      $region82: #{tit_forward.1} parent=11 // pred_check_branch
        %567 = sbr.rel (%p565) target = $region84
      $region83: #{tit_forward.1} parent=11 // pred_region
        _
      $region84: #{tit_forward.1} parent=11 // pred_fallthru
        _
      // Predicated region
      $region85: #{tit_forward.1} parent=11 // pred_check
        %p568 = pneg %p452
      $region86: #{tit_forward.1} parent=11 // pred_check_branch
        %570 = sbr.rel (%p568) target = $region88
      $region87: #{tit_forward.1} parent=11 // pred_region
        _
      $region88: #{tit_forward.1} parent=11 // pred_fallthru
        _
      // Predicated region
      $region89: #{tit_forward.1} parent=11 // pred_check
        %p571 = pneg %p473
      $region90: #{tit_forward.1} parent=11 // pred_check_branch
        %573 = sbr.rel (%p571) target = $region92
      $region91: #{tit_forward.1} parent=11 // pred_region
        _
      $region92: #{tit_forward.1} parent=11 // pred_fallthru
        _
    $region12: #{tit_forward.1} parent=5 // pred_fallthru
      _
    %p574 = scmp.lt.s32.totalorder %s27, 2
    // Predicated region
    $region93: #{tit_forward.1} parent=5 // pred_check
      %p575 = pneg %p574
    $region94: #{tit_forward.1} parent=5 // pred_check_branch
      %577 = sbr.rel (%p575) target = $region96
    $region95: #{tit_forward.1} parent=5 // pred_region
      // Predicated region
      $region97: #{tit_forward.1} parent=95 // pred_check
        %p578 = pneg %p47
      $region98: #{tit_forward.1} parent=95 // pred_check_branch
        %580 = sbr.rel (%p578) target = $region100
      $region99: #{tit_forward.1} parent=95 // pred_region
        %s581 = smul.u32 5, %s27
        %p582 = scmp.lt.s32.totalorder %s581, 9
        %s583 = scalar_select %p582, %s581, 9
        %s584 = smul.addr %s583, 6
        %s585 = smul.addr %s584, 8
        %s586 = scalar_lea.vmem %s0, %s585
        %s587 = smul.u32 5, %s27
      $region100: #{tit_forward.1} parent=95 // pred_fallthru
        _
    $region96: #{tit_forward.1} parent=5 // pred_fallthru
      _
    %p588 = scmp.le.s32.totalorder 1, %s27
    %p589 = scmp.lt.s32.totalorder %s27, 3
    %p590 = pnand %p588, %p589
    %p591 = pneg %p590
    // Predicated region
    $region101: #{tit_forward.1} parent=5 // pred_check
      _
    $region102: #{tit_forward.1} parent=5 // pred_check_branch
      %593 = sbr.rel (%p590) target = $region104
    $region103: #{tit_forward.1} parent=5 // pred_region
      %s594 = ssub.s32 %s27, 1
      %s595 = smul.u32 5, %s32
      %p596 = scmp.lt.s32.totalorder %s595, 9
      %s597 = scalar_select %p596, %s595, 9
      %s598 = smul.addr %s597, 6
      %s599 = smul.addr %s598, 8
      %s600 = scalar_lea.vmem %s0, %s599
      %p601 = pneg %p53
      %p602 = pneg %p50
      %p603 = pneg %p74
      %p604 = pneg %p71
      %p605 = pneg %p95
      %p606 = pneg %p92
      %p607 = pneg %p116
      %p608 = pneg %p113
      %p609 = pneg %p137
      %p610 = pneg %p134
      %p611 = pneg %p158
      %p612 = pneg %p155
      %p613 = pneg %p179
      %p614 = pneg %p176
      %p615 = pneg %p200
      %p616 = pneg %p197
      %p617 = pneg %p221
      %p618 = pneg %p218
      %p619 = pneg %p242
      %p620 = pneg %p239
      %p621 = pneg %p263
      %p622 = pneg %p260
      %p623 = pneg %p284
      %p624 = pneg %p281
      %p625 = pneg %p305
      %p626 = pneg %p302
      %p627 = pneg %p326
      %p628 = pneg %p323
      %p629 = pneg %p347
      %p630 = pneg %p344
      %p631 = pneg %p368
      %p632 = pneg %p365
      %p633 = pneg %p389
      %p634 = pneg %p386
      %p635 = pneg %p410
      %p636 = pneg %p407
      %p637 = pneg %p431
      %p638 = pneg %p428
      %p639 = pneg %p452
      %p640 = pneg %p449
      %p641 = pneg %p473
      %p642 = pneg %p470
      %p643 = pneg %p499
      %p644 = pneg %p496
      %p645 = scmp.lt.s32.totalorder %s32, 1
      %s646 = scalar_select %p645, %s32, 1
      %s647 = smul.addr %s646, 8
      %s648 = scalar_lea.vmem %s21, %s647
      %s649 = smul.u32 5, %s32
      %p650 = scmp.lt.s32.totalorder %s649, 9
      %s651 = scalar_select %p650, %s649, 9
      %s652 = smul.addr %s651, 6
      %s653 = smul.addr %s652, 8
      %s654 = scalar_lea.vmem %s0, %s653
      %s655 = smul.u32 5, %s32
      %p656 = scmp.lt.s32.totalorder %s32, 1
      %s657 = scalar_select %p656, %s32, 1
      %s658 = smul.addr %s657, 8
      %s659 = scalar_lea.vmem %s21, %s658
      %v660 = vld [vmem:[%s654] sm:$0xff]
      %v661 = vld [vmem:[%s654 + $0x8] sm:$0xff]
      %v662 = vld [vmem:[%s654 + $0x10] sm:$0xff]
      %v663 = vld [vmem:[%s654 + $0x18] sm:$0xff]
      %v664 = vld [vmem:[%s654 + $0x20] sm:$0xff]
      %v665 = vld [vmem:[%s654 + $0x28] sm:$0xff]
      %v666 = vld [vmem:[%s654 + $0x30] sm:$0xff]
      %v667 = vld [vmem:[%s654 + $0x38] sm:$0xff]
      %v668 = vld [vmem:[%s654 + $0x40] sm:$0xff]
      %v669 = vld [vmem:[%s654 + $0x48] sm:$0xff]
      %v670 = vld [vmem:[%s654 + $0x50] sm:$0xff]
      %v671 = vld [vmem:[%s654 + $0x58] sm:$0xff]
      %v672 = vld [vmem:[%s654 + $0x60] sm:$0xff]
      %v673 = vld [vmem:[%s654 + $0x68] sm:$0xff]
      %v674 = vld [vmem:[%s654 + $0x70] sm:$0xff]
      %v675 = vld [vmem:[%s654 + $0x78] sm:$0xff]
      %v676 = vld [vmem:[%s654 + $0x80] sm:$0xff]
      %v677 = vld [vmem:[%s654 + $0x88] sm:$0xff]
      %v678 = vld [vmem:[%s654 + $0x90] sm:$0xff]
      %v679 = vld [vmem:[%s654 + $0x98] sm:$0xff]
      %v680 = vld [vmem:[%s654 + $0xa0] sm:$0xff]
      %v681 = vld [vmem:[%s654 + $0xa8] sm:$0xff]
      %v682 = vld [vmem:[%s654 + $0xb0] sm:$0xff]
      %v683 = vld [vmem:[%s654 + $0xb8] sm:$0xff]
      %v684 = vld [vmem:[%s654 + $0xc0] sm:$0xff]
      %v685 = vld [vmem:[%s654 + $0xc8] sm:$0xff]
      %v686 = vld [vmem:[%s654 + $0xd0] sm:$0xff]
      %v687 = vld [vmem:[%s654 + $0xd8] sm:$0xff]
      %v688 = vld [vmem:[%s654 + $0xe0] sm:$0xff]
      %v689 = vld [vmem:[%s654 + $0xe8] sm:$0xff]
      %v690 = vld [vmem:[%s2] sm:$0xff]
      %v691 = vld [vmem:[%s2 + $0x8] sm:$0xff]
      %v692 = vld [vmem:[%s2 + $0x10] sm:$0xff]
      %v693 = vld [vmem:[%s2 + $0x18] sm:$0xff]
      %v694 = vld [vmem:[%s2 + $0x20] sm:$0xff]
      %v695 = vld [vmem:[%s2 + $0x28] sm:$0xff]
      %v696 = vld [vmem:[%s2 + $0x30] sm:$0xff]
      %v697 = vld [vmem:[%s2 + $0x38] sm:$0xff]
      %v698 = vld [vmem:[%s2 + $0x40] sm:$0xff]
      %v699 = vld [vmem:[%s2 + $0x48] sm:$0xff]
      %v700 = vld [vmem:[%s2 + $0x50] sm:$0xff]
      %v701 = vld [vmem:[%s2 + $0x58] sm:$0xff]
      %v702 = vld [vmem:[%s2 + $0x60] sm:$0xff]
      %v703 = vld [vmem:[%s2 + $0x68] sm:$0xff]
      %v704 = vld [vmem:[%s2 + $0x70] sm:$0xff]
      %v705 = vld [vmem:[%s2 + $0x78] sm:$0xff]
      %v706 = vld [vmem:[%s2 + $0x80] sm:$0xff]
      %v707 = vld [vmem:[%s2 + $0x88] sm:$0xff]
      %v708 = vld [vmem:[%s2 + $0x90] sm:$0xff]
      %v709 = vld [vmem:[%s2 + $0x98] sm:$0xff]
      %v710 = vld [vmem:[%s2 + $0xa0] sm:$0xff]
      %v711 = vld [vmem:[%s2 + $0xa8] sm:$0xff]
      %v712 = vld [vmem:[%s2 + $0xb0] sm:$0xff]
      %v713 = vld [vmem:[%s2 + $0xb8] sm:$0xff]
      %v714 = vld [vmem:[%s2 + $0xc0] sm:$0xff]
      %v715 = vld [vmem:[%s2 + $0xc8] sm:$0xff]
      %v716 = vld [vmem:[%s2 + $0xd0] sm:$0xff]
      %v717 = vld [vmem:[%s2 + $0xd8] sm:$0xff]
      %v718 = vld [vmem:[%s2 + $0xe0] sm:$0xff]
      %v719 = vld [vmem:[%s2 + $0xe8] sm:$0xff]
      %v720 = vld [vmem:[%s2 + $0xf0] sm:$0xff]
      %v721 = vld [vmem:[%s2 + $0xf8] sm:$0xff]
      %v722 = vld [vmem:[%s2 + $0x100] sm:$0xff]
      %v723 = vld [vmem:[%s2 + $0x108] sm:$0xff]
      %v724 = vld [vmem:[%s2 + $0x110] sm:$0xff]
      %v725 = vld [vmem:[%s2 + $0x118] sm:$0xff]
      %v726 = vld [vmem:[%s2 + $0x120] sm:$0xff]
      %v727 = vld [vmem:[%s2 + $0x128] sm:$0xff]
      %v728 = vld [vmem:[%s2 + $0x130] sm:$0xff]
      %v729 = vld [vmem:[%s2 + $0x138] sm:$0xff]
      %v730 = vld [vmem:[%s2 + $0x140] sm:$0xff]
      %v731 = vld [vmem:[%s2 + $0x148] sm:$0xff]
      %v732 = vld [vmem:[%s2 + $0x150] sm:$0xff]
      %v733 = vld [vmem:[%s2 + $0x158] sm:$0xff]
      %v734 = vld [vmem:[%s2 + $0x160] sm:$0xff]
      %v735 = vld [vmem:[%s2 + $0x168] sm:$0xff]
      %v736 = vld [vmem:[%s2 + $0x170] sm:$0xff]
      %v737 = vld [vmem:[%s2 + $0x178] sm:$0xff]
      %v738 = vld [vmem:[%s2 + $0x180] sm:$0xff]
      %v739 = vld [vmem:[%s2 + $0x188] sm:$0xff]
      %v740 = vld [vmem:[%s2 + $0x190] sm:$0xff]
      %v741 = vld [vmem:[%s2 + $0x198] sm:$0xff]
      %v742 = vld [vmem:[%s2 + $0x1a0] sm:$0xff]
      %v743 = vld [vmem:[%s2 + $0x1a8] sm:$0xff]
      %v744 = vld [vmem:[%s2 + $0x1b0] sm:$0xff]
      %v745 = vld [vmem:[%s2 + $0x1b8] sm:$0xff]
      %v746 = vld [vmem:[%s2 + $0x1c0] sm:$0xff]
      %v747 = vld [vmem:[%s2 + $0x1c8] sm:$0xff]
      %v748 = vld [vmem:[%s2 + $0x1d0] sm:$0xff]
      %v749 = vld [vmem:[%s2 + $0x1d8] sm:$0xff]
      %v750 = vld [vmem:[%s2 + $0x1e0] sm:$0xff]
      %v751 = vld [vmem:[%s2 + $0x1e8] sm:$0xff]
      %v752 = vld [vmem:[%s2 + $0x1f0] sm:$0xff]
      %v753 = vld [vmem:[%s2 + $0x1f8] sm:$0xff]
      %v754 = vld [vmem:[%s2 + $0x200] sm:$0xff]
      %v755 = vld [vmem:[%s2 + $0x208] sm:$0xff]
      %v756 = vld [vmem:[%s2 + $0x210] sm:$0xff]
      %v757 = vld [vmem:[%s2 + $0x218] sm:$0xff]
      %v758 = vld [vmem:[%s2 + $0x220] sm:$0xff]
      %v759 = vld [vmem:[%s2 + $0x228] sm:$0xff]
      %v760 = vld [vmem:[%s2 + $0x230] sm:$0xff]
      %v761 = vld [vmem:[%s2 + $0x238] sm:$0xff]
      %v762 = vld [vmem:[%s2 + $0x240] sm:$0xff]
      %v763 = vld [vmem:[%s2 + $0x248] sm:$0xff]
      %v764 = vld [vmem:[%s2 + $0x250] sm:$0xff]
      %v765 = vld [vmem:[%s2 + $0x258] sm:$0xff]
      %v766 = vld [vmem:[%s2 + $0x260] sm:$0xff]
      %v767 = vld [vmem:[%s2 + $0x268] sm:$0xff]
      %v768 = vld [vmem:[%s2 + $0x270] sm:$0xff]
      %v769 = vld [vmem:[%s2 + $0x278] sm:$0xff]
      %v770 = vld [vmem:[%s2 + $0x280] sm:$0xff]
      %v771 = vld [vmem:[%s2 + $0x288] sm:$0xff]
      %v772 = vld [vmem:[%s2 + $0x290] sm:$0xff]
      %v773 = vld [vmem:[%s2 + $0x298] sm:$0xff]
      %v774 = vld [vmem:[%s2 + $0x2a0] sm:$0xff]
      %v775 = vld [vmem:[%s2 + $0x2a8] sm:$0xff]
      %v776 = vld [vmem:[%s2 + $0x2b0] sm:$0xff]
      %v777 = vld [vmem:[%s2 + $0x2b8] sm:$0xff]
      %v778 = vld [vmem:[%s2 + $0x2c0] sm:$0xff]
      %v779 = vld [vmem:[%s2 + $0x2c8] sm:$0xff]
      %v780 = vld [vmem:[%s2 + $0x2d0] sm:$0xff]
      %v781 = vld [vmem:[%s2 + $0x2d8] sm:$0xff]
      %v782 = vld [vmem:[%s2 + $0x2e0] sm:$0xff]
      %v783 = vld [vmem:[%s2 + $0x2e8] sm:$0xff]
      %v784 = vld [vmem:[%s2 + $0x2f0] sm:$0xff]
      %v785 = vld [vmem:[%s2 + $0x2f8] sm:$0xff]
      %v786 = vld [vmem:[%s1] sm:$0xff]
      %v787 = vld [vmem:[%s1 + $0x8] sm:$0xff]
      %v788 = vld [vmem:[%s1 + $0x10] sm:$0xff]
      %v789 = vld [vmem:[%s1 + $0x18] sm:$0xff]
      %v790 = vld [vmem:[%s1 + $0x20] sm:$0xff]
      %791 = vmatprep.subr.mxu0 0.0
      %792 = vmatpush1.msra.mxu0 %v705
      %793 = vmatprep.subr.mxu0 0.0
      %794 = vmatpush1.msra.mxu0 %v704
      %795 = vmatprep.subr.mxu0 0.0
      %796 = vmatpush1.msra.mxu0 %v703
      %797 = vmatprep.subr.mxu0 0.0
      %798 = vmatpush1.msra.mxu0 %v702
      %799 = vmatprep.subr.mxu0 0.0
      %800 = vmatpush1.msra.mxu0 %v701
      %801 = vmatprep.subr.mxu0 0.0
      %802 = vmatpush1.msra.mxu0 %v700
      %803 = vmatprep.subr.mxu0 0.0
      %804 = vmatpush1.msra.mxu0 %v699
      %805 = vmatprep.subr.mxu0 0.0
      %806 = vmatpush1.msra.mxu0 %v698
      %807 = vmatprep.subr.mxu0 0.0
      %808 = vmatpush1.msra.mxu0 %v697
      %809 = vmatprep.subr.mxu0 0.0
      %810 = vmatpush1.msra.mxu0 %v696
      %811 = vmatprep.subr.mxu0 0.0
      %812 = vmatpush1.msra.mxu0 %v695
      %813 = vmatprep.subr.mxu0 0.0
      %814 = vmatpush1.msra.mxu0 %v694
      %815 = vmatprep.subr.mxu0 0.0
      %816 = vmatpush1.msra.mxu0 %v693
      %817 = vmatprep.subr.mxu0 0.0
      %818 = vmatpush1.msra.mxu0 %v692
      %819 = vmatprep.subr.mxu0 0.0
      %820 = vmatpush1.msra.mxu0 %v691
      %821 = vmatprep.subr.mxu0 0.0
      %822 = vmatpush1.msra.mxu0 %v690
      %823 = vmatprep.subr.mxu0 0.0
      %824 = vmatpush2.msra.mxu0 %v721
      %825 = vmatprep.subr.mxu0 0.0
      %826 = vmatpush2.msra.mxu0 %v720
      %827 = vmatprep.subr.mxu0 0.0
      %828 = vmatpush2.msra.mxu0 %v719
      %829 = vmatprep.subr.mxu0 0.0
      %830 = vmatpush2.msra.mxu0 %v718
      %831 = vmatprep.subr.mxu0 0.0
      %832 = vmatpush2.msra.mxu0 %v717
      %833 = vmatprep.subr.mxu0 0.0
      %834 = vmatpush2.msra.mxu0 %v716
      %835 = vmatprep.subr.mxu0 0.0
      %836 = vmatpush2.msra.mxu0 %v715
      %837 = vmatprep.subr.mxu0 0.0
      %838 = vmatpush2.msra.mxu0 %v714
      %839 = vmatprep.subr.mxu0 0.0
      %840 = vmatpush2.msra.mxu0 %v713
      %841 = vmatprep.subr.mxu0 0.0
      %842 = vmatpush2.msra.mxu0 %v712
      %843 = vmatprep.subr.mxu0 0.0
      %844 = vmatpush2.msra.mxu0 %v711
      %845 = vmatprep.subr.mxu0 0.0
      %846 = vmatpush2.msra.mxu0 %v710
      %847 = vmatprep.subr.mxu0 0.0
      %848 = vmatpush2.msra.mxu0 %v709
      %849 = vmatprep.subr.mxu0 0.0
      %850 = vmatpush2.msra.mxu0 %v708
      %851 = vmatprep.subr.mxu0 0.0
      %852 = vmatpush2.msra.mxu0 %v707
      %853 = vmatprep.subr.mxu0 0.0
      %854 = vmatpush2.msra.mxu0 %v706
      %855 = vmatprep.mubr.f32.mxu0 %v661
      %856 = vmatmul.mubr.f32.gmra.mxu0 %v660
      %v857 = vpop.f32.mrf.mxu0
      %v858 = vadd.f32 %v786, %v857
      %v859 = vpop.f32.mrf.mxu0
      %860 = vmatprep.mubr.f32.mxu0 %v667
      %861 = vmatmul.mubr.f32.gmra.mxu0 %v666
      %v862 = vpop.f32.mrf.mxu0
      %v863 = vadd.f32 %v787, %v862
      %v864 = vpop.f32.mrf.mxu0
      %865 = vmatprep.mubr.f32.mxu0 %v673
      %866 = vmatmul.mubr.f32.gmra.mxu0 %v672
      %v867 = vpop.f32.mrf.mxu0
      %v868 = vadd.f32 %v788, %v867
      %v869 = vpop.f32.mrf.mxu0
      %870 = vmatprep.mubr.f32.mxu0 %v679
      %871 = vmatmul.mubr.f32.gmra.mxu0 %v678
      %v872 = vpop.f32.mrf.mxu0
      %v873 = vadd.f32 %v789, %v872
      %v874 = vpop.f32.mrf.mxu0
      %875 = vmatprep.mubr.f32.mxu0 %v685
      %876 = vmatmul.mubr.f32.gmra.mxu0 %v684
      %v877 = vpop.f32.mrf.mxu0
      %v878 = vadd.f32 %v790, %v877
      %v879 = vpop.f32.mrf.mxu0
      %880 = vdwg.mxu0
      %881 = vmatprep.subr.mxu0 0.0
      %882 = vmatpush1.msra.mxu0 %v737
      %883 = vmatprep.subr.mxu0 0.0
      %884 = vmatpush1.msra.mxu0 %v736
      %885 = vmatprep.subr.mxu0 0.0
      %886 = vmatpush1.msra.mxu0 %v735
      %887 = vmatprep.subr.mxu0 0.0
      %888 = vmatpush1.msra.mxu0 %v734
      %889 = vmatprep.subr.mxu0 0.0
      %890 = vmatpush1.msra.mxu0 %v733
      %891 = vmatprep.subr.mxu0 0.0
      %892 = vmatpush1.msra.mxu0 %v732
      %893 = vmatprep.subr.mxu0 0.0
      %894 = vmatpush1.msra.mxu0 %v731
      %895 = vmatprep.subr.mxu0 0.0
      %896 = vmatpush1.msra.mxu0 %v730
      %897 = vmatprep.subr.mxu0 0.0
      %898 = vmatpush1.msra.mxu0 %v729
      %899 = vmatprep.subr.mxu0 0.0
      %900 = vmatpush1.msra.mxu0 %v728
      %901 = vmatprep.subr.mxu0 0.0
      %902 = vmatpush1.msra.mxu0 %v727
      %903 = vmatprep.subr.mxu0 0.0
      %904 = vmatpush1.msra.mxu0 %v726
      %905 = vmatprep.subr.mxu0 0.0
      %906 = vmatpush1.msra.mxu0 %v725
      %907 = vmatprep.subr.mxu0 0.0
      %908 = vmatpush1.msra.mxu0 %v724
      %909 = vmatprep.subr.mxu0 0.0
      %910 = vmatpush1.msra.mxu0 %v723
      %911 = vmatprep.subr.mxu0 0.0
      %912 = vmatpush1.msra.mxu0 %v722
      %913 = vmatprep.subr.mxu0 0.0
      %914 = vmatpush2.msra.mxu0 %v753
      %915 = vmatprep.subr.mxu0 0.0
      %916 = vmatpush2.msra.mxu0 %v752
      %917 = vmatprep.subr.mxu0 0.0
      %918 = vmatpush2.msra.mxu0 %v751
      %919 = vmatprep.subr.mxu0 0.0
      %920 = vmatpush2.msra.mxu0 %v750
      %921 = vmatprep.subr.mxu0 0.0
      %922 = vmatpush2.msra.mxu0 %v749
      %923 = vmatprep.subr.mxu0 0.0
      %924 = vmatpush2.msra.mxu0 %v748
      %925 = vmatprep.subr.mxu0 0.0
      %926 = vmatpush2.msra.mxu0 %v747
      %927 = vmatprep.subr.mxu0 0.0
      %928 = vmatpush2.msra.mxu0 %v746
      %929 = vmatprep.subr.mxu0 0.0
      %930 = vmatpush2.msra.mxu0 %v745
      %931 = vmatprep.subr.mxu0 0.0
      %932 = vmatpush2.msra.mxu0 %v744
      %933 = vmatprep.subr.mxu0 0.0
      %934 = vmatpush2.msra.mxu0 %v743
      %935 = vmatprep.subr.mxu0 0.0
      %936 = vmatpush2.msra.mxu0 %v742
      %937 = vmatprep.subr.mxu0 0.0
      %938 = vmatpush2.msra.mxu0 %v741
      %939 = vmatprep.subr.mxu0 0.0
      %940 = vmatpush2.msra.mxu0 %v740
      %941 = vmatprep.subr.mxu0 0.0
      %942 = vmatpush2.msra.mxu0 %v739
      %943 = vmatprep.subr.mxu0 0.0
      %944 = vmatpush2.msra.mxu0 %v738
      %945 = vmatprep.mubr.f32.mxu0 %v663
      %946 = vmatmul.mubr.f32.gmra.mxu0 %v662
      %v947 = vpop.f32.mrf.mxu0
      %v948 = vadd.f32 %v858, %v947
      %v949 = vpop.f32.mrf.mxu0
      %950 = vmatprep.mubr.f32.mxu0 %v669
      %951 = vmatmul.mubr.f32.gmra.mxu0 %v668
      %v952 = vpop.f32.mrf.mxu0
      %v953 = vadd.f32 %v863, %v952
      %v954 = vpop.f32.mrf.mxu0
      %955 = vmatprep.mubr.f32.mxu0 %v675
      %956 = vmatmul.mubr.f32.gmra.mxu0 %v674
      %v957 = vpop.f32.mrf.mxu0
      %v958 = vadd.f32 %v868, %v957
      %v959 = vpop.f32.mrf.mxu0
      %960 = vmatprep.mubr.f32.mxu0 %v681
      %961 = vmatmul.mubr.f32.gmra.mxu0 %v680
      %v962 = vpop.f32.mrf.mxu0
      %v963 = vadd.f32 %v873, %v962
      %v964 = vpop.f32.mrf.mxu0
      %965 = vmatprep.mubr.f32.mxu0 %v687
      %966 = vmatmul.mubr.f32.gmra.mxu0 %v686
      %v967 = vpop.f32.mrf.mxu0
      %v968 = vadd.f32 %v878, %v967
      %v969 = vpop.f32.mrf.mxu0
      %970 = vdwg.mxu0
      %971 = vmatprep.subr.mxu0 0.0
      %972 = vmatpush1.msra.mxu0 %v769
      %973 = vmatprep.subr.mxu0 0.0
      %974 = vmatpush1.msra.mxu0 %v768
      %975 = vmatprep.subr.mxu0 0.0
      %976 = vmatpush1.msra.mxu0 %v767
      %977 = vmatprep.subr.mxu0 0.0
      %978 = vmatpush1.msra.mxu0 %v766
      %979 = vmatprep.subr.mxu0 0.0
      %980 = vmatpush1.msra.mxu0 %v765
      %981 = vmatprep.subr.mxu0 0.0
      %982 = vmatpush1.msra.mxu0 %v764
      %983 = vmatprep.subr.mxu0 0.0
      %984 = vmatpush1.msra.mxu0 %v763
      %985 = vmatprep.subr.mxu0 0.0
      %986 = vmatpush1.msra.mxu0 %v762
      %987 = vmatprep.subr.mxu0 0.0
      %988 = vmatpush1.msra.mxu0 %v761
      %989 = vmatprep.subr.mxu0 0.0
      %990 = vmatpush1.msra.mxu0 %v760
      %991 = vmatprep.subr.mxu0 0.0
      %992 = vmatpush1.msra.mxu0 %v759
      %993 = vmatprep.subr.mxu0 0.0
      %994 = vmatpush1.msra.mxu0 %v758
      %995 = vmatprep.subr.mxu0 0.0
      %996 = vmatpush1.msra.mxu0 %v757
      %997 = vmatprep.subr.mxu0 0.0
      %998 = vmatpush1.msra.mxu0 %v756
      %999 = vmatprep.subr.mxu0 0.0
      %1000 = vmatpush1.msra.mxu0 %v755
      %1001 = vmatprep.subr.mxu0 0.0
      %1002 = vmatpush1.msra.mxu0 %v754
      %1003 = vmatprep.subr.mxu0 0.0
      %1004 = vmatpush2.msra.mxu0 %v785
      %1005 = vmatprep.subr.mxu0 0.0
      %1006 = vmatpush2.msra.mxu0 %v784
      %1007 = vmatprep.subr.mxu0 0.0
      %1008 = vmatpush2.msra.mxu0 %v783
      %1009 = vmatprep.subr.mxu0 0.0
      %1010 = vmatpush2.msra.mxu0 %v782
      %1011 = vmatprep.subr.mxu0 0.0
      %1012 = vmatpush2.msra.mxu0 %v781
      %1013 = vmatprep.subr.mxu0 0.0
      %1014 = vmatpush2.msra.mxu0 %v780
      %1015 = vmatprep.subr.mxu0 0.0
      %1016 = vmatpush2.msra.mxu0 %v779
      %1017 = vmatprep.subr.mxu0 0.0
      %1018 = vmatpush2.msra.mxu0 %v778
      %1019 = vmatprep.subr.mxu0 0.0
      %1020 = vmatpush2.msra.mxu0 %v777
      %1021 = vmatprep.subr.mxu0 0.0
      %1022 = vmatpush2.msra.mxu0 %v776
      %1023 = vmatprep.subr.mxu0 0.0
      %1024 = vmatpush2.msra.mxu0 %v775
      %1025 = vmatprep.subr.mxu0 0.0
      %1026 = vmatpush2.msra.mxu0 %v774
      %1027 = vmatprep.subr.mxu0 0.0
      %1028 = vmatpush2.msra.mxu0 %v773
      %1029 = vmatprep.subr.mxu0 0.0
      %1030 = vmatpush2.msra.mxu0 %v772
      %1031 = vmatprep.subr.mxu0 0.0
      %1032 = vmatpush2.msra.mxu0 %v771
      %1033 = vmatprep.subr.mxu0 0.0
      %1034 = vmatpush2.msra.mxu0 %v770
      %1035 = vmatprep.mubr.f32.mxu0 %v665
      %1036 = vmatmul.mubr.f32.gmra.mxu0 %v664
      %v1037 = vpop.f32.mrf.mxu0
      %v1038 = vadd.f32 %v948, %v1037
      %v1039 = vpop.f32.mrf.mxu0
      %1040 = vmatprep.mubr.f32.mxu0 %v671
      %1041 = vmatmul.mubr.f32.gmra.mxu0 %v670
      %v1042 = vpop.f32.mrf.mxu0
      %v1043 = vadd.f32 %v953, %v1042
      %v1044 = vpop.f32.mrf.mxu0
      %1045 = vmatprep.mubr.f32.mxu0 %v677
      %1046 = vmatmul.mubr.f32.gmra.mxu0 %v676
      %v1047 = vpop.f32.mrf.mxu0
      %v1048 = vadd.f32 %v958, %v1047
      %v1049 = vpop.f32.mrf.mxu0
      %1050 = vmatprep.mubr.f32.mxu0 %v683
      %1051 = vmatmul.mubr.f32.gmra.mxu0 %v682
      %v1052 = vpop.f32.mrf.mxu0
      %v1053 = vadd.f32 %v963, %v1052
      %v1054 = vpop.f32.mrf.mxu0
      %1055 = vmatprep.mubr.f32.mxu0 %v689
      %1056 = vmatmul.mubr.f32.gmra.mxu0 %v688
      %v1057 = vpop.f32.mrf.mxu0
      %v1058 = vadd.f32 %v968, %v1057
      %v1059 = vpop.f32.mrf.mxu0
      %1060 = vdwg.mxu0
      %v1061 = vld [vmem:[%s3] sm:$0xff]
      %v1062 = vld [vmem:[%s3 + $0x8] sm:$0xff]
      %v1063 = vld [vmem:[%s3 + $0x10] sm:$0xff]
      %v1064 = vld [vmem:[%s3 + $0x18] sm:$0xff]
      %v1065 = vld [vmem:[%s4] sm:$0x1]
      %v1067 = vlaneseq
      %v1068 = vshrl.u32 %v1067, 7
      %v1069 = vsub.s32 0, %v1068
      %v1070 = vrot.slane %v1065, %v1069
      %vm1072 = vcmask 261120
      %v1074 = vsel %vm1072, %v1038, 0
      %v1077 = vsel %vm1072, %v1043, 0
      %v1080 = vsel %vm1072, %v1048, 0
      %v1083 = vsel %vm1072, %v1053, 0
      %v1086 = vsel %vm1072, %v1058, 0
      %1088 = vmatprep.subr.mxu0 0.0
      %1089 = vmatpush1.msra.mxu0 0.0
      %1090 = vmatprep.subr.mxu0 0.0
      %1091 = vmatpush1.msra.mxu0 0.0
      %1092 = vmatprep.subr.mxu0 0.0
      %1093 = vmatpush1.msra.mxu0 0.0
      %1094 = vmatprep.subr.mxu0 0.0
      %1095 = vmatpush1.msra.mxu0 0.0
      %1096 = vmatprep.subr.mxu0 0.0
      %1097 = vmatpush1.msra.mxu0 0.0
      %1098 = vmatprep.subr.mxu0 0.0
      %1099 = vmatpush1.msra.mxu0 0.0
      %1100 = vmatprep.subr.mxu0 0.0
      %1101 = vmatpush1.msra.mxu0 0.0
      %1102 = vmatprep.subr.mxu0 0.0
      %1103 = vmatpush1.msra.mxu0 0.0
      %1104 = vmatprep.subr.mxu0 0.0
      %1105 = vmatpush1.msra.mxu0 0.0
      %1106 = vmatprep.subr.mxu0 0.0
      %1107 = vmatpush1.msra.mxu0 0.0
      %1108 = vmatprep.subr.mxu0 0.0
      %1109 = vmatpush1.msra.mxu0 0.0
      %1110 = vmatprep.subr.mxu0 0.0
      %1111 = vmatpush1.msra.mxu0 0.0
      %1112 = vmatprep.subr.mxu0 0.0
      %1113 = vmatpush1.msra.mxu0 %v1064
      %1114 = vmatprep.subr.mxu0 0.0
      %1115 = vmatpush1.msra.mxu0 %v1063
      %1116 = vmatprep.subr.mxu0 0.0
      %1117 = vmatpush1.msra.mxu0 %v1062
      %1118 = vmatprep.subr.mxu0 0.0
      %1119 = vmatpush1.msra.mxu0 %v1061
      %1120 = vmatprep.subr.mxu0 0.0
      %1121 = vmatpush2.msra.mxu0 0.0
      %1122 = vmatprep.subr.mxu0 0.0
      %1123 = vmatpush2.msra.mxu0 0.0
      %1124 = vmatprep.subr.mxu0 0.0
      %1125 = vmatpush2.msra.mxu0 0.0
      %1126 = vmatprep.subr.mxu0 0.0
      %1127 = vmatpush2.msra.mxu0 0.0
      %1128 = vmatprep.subr.mxu0 0.0
      %1129 = vmatpush2.msra.mxu0 0.0
      %1130 = vmatprep.subr.mxu0 0.0
      %1131 = vmatpush2.msra.mxu0 0.0
      %1132 = vmatprep.subr.mxu0 0.0
      %1133 = vmatpush2.msra.mxu0 0.0
      %1134 = vmatprep.subr.mxu0 0.0
      %1135 = vmatpush2.msra.mxu0 0.0
      %1136 = vmatprep.subr.mxu0 0.0
      %1137 = vmatpush2.msra.mxu0 0.0
      %1138 = vmatprep.subr.mxu0 0.0
      %1139 = vmatpush2.msra.mxu0 0.0
      %1140 = vmatprep.subr.mxu0 0.0
      %1141 = vmatpush2.msra.mxu0 0.0
      %1142 = vmatprep.subr.mxu0 0.0
      %1143 = vmatpush2.msra.mxu0 0.0
      %1144 = vmatprep.subr.mxu0 0.0
      %1145 = vmatpush2.msra.mxu0 0.0
      %1146 = vmatprep.subr.mxu0 0.0
      %1147 = vmatpush2.msra.mxu0 0.0
      %1148 = vmatprep.subr.mxu0 0.0
      %1149 = vmatpush2.msra.mxu0 0.0
      %1150 = vmatprep.subr.mxu0 0.0
      %1151 = vmatpush2.msra.mxu0 0.0
      %1152 = vmatprep.mubr.f32.mxu0 0.0
      %1153 = vmatmul.mubr.f32.gmra.mxu0 %v1074
      %v1154 = vpop.f32.mrf.mxu0
      %v1155 = vadd.f32 %v1070, %v1154
      %v1156 = vpop.f32.mrf.mxu0
      %1157 = vmatprep.mubr.f32.mxu0 0.0
      %1158 = vmatmul.mubr.f32.gmra.mxu0 %v1077
      %v1159 = vpop.f32.mrf.mxu0
      %v1160 = vadd.f32 %v1070, %v1159
      %v1161 = vpop.f32.mrf.mxu0
      %1162 = vmatprep.mubr.f32.mxu0 0.0
      %1163 = vmatmul.mubr.f32.gmra.mxu0 %v1080
      %v1164 = vpop.f32.mrf.mxu0
      %v1165 = vadd.f32 %v1070, %v1164
      %v1166 = vpop.f32.mrf.mxu0
      %1167 = vmatprep.mubr.f32.mxu0 0.0
      %1168 = vmatmul.mubr.f32.gmra.mxu0 %v1083
      %v1169 = vpop.f32.mrf.mxu0
      %v1170 = vadd.f32 %v1070, %v1169
      %v1171 = vpop.f32.mrf.mxu0
      %1172 = vmatprep.mubr.f32.mxu0 0.0
      %1173 = vmatmul.mubr.f32.gmra.mxu0 %v1086
      %v1174 = vpop.f32.mrf.mxu0
      %v1175 = vadd.f32 %v1070, %v1174
      %v1176 = vpop.f32.mrf.mxu0
      %1177 = vdwg.mxu0
      %v1178 = vmax.f32 %v1155, 0.0
      %v1179 = vmax.f32 %v1160, 0.0
      %v1180 = vmax.f32 %v1165, 0.0
      %v1181 = vmax.f32 %v1170, 0.0
      %v1182 = vmax.f32 %v1175, 0.0
      %v1183 = vld [vmem:[%s5] sm:$0xff]
      %v1184 = vld [vmem:[%s5 + $0x8] sm:$0xff]
      %v1185 = vld [vmem:[%s5 + $0x10] sm:$0xff]
      %v1186 = vld [vmem:[%s5 + $0x18] sm:$0xff]
      %v1187 = vld [vmem:[%s5 + $0x20] sm:$0xff]
      %v1188 = vld [vmem:[%s5 + $0x28] sm:$0xff]
      %v1189 = vld [vmem:[%s5 + $0x30] sm:$0xff]
      %v1190 = vld [vmem:[%s6] sm:$0x1]
      %v1192 = vlaneseq
      %v1193 = vshrl.u32 %v1192, 7
      %v1194 = vsub.s32 0, %v1193
      %v1195 = vrot.slane %v1190, %v1194
      %vm1197 = vcmask 457728
      %v1199 = vsel %vm1197, %v1178, 0
      %v1202 = vsel %vm1197, %v1179, 0
      %v1205 = vsel %vm1197, %v1180, 0
      %v1208 = vsel %vm1197, %v1181, 0
      %v1211 = vsel %vm1197, %v1182, 0
      %1213 = vmatprep.subr.mxu0 0.0
      %1214 = vmatpush1.msra.mxu0 0.0
      %1215 = vmatprep.subr.mxu0 0.0
      %1216 = vmatpush1.msra.mxu0 0.0
      %1217 = vmatprep.subr.mxu0 0.0
      %1218 = vmatpush1.msra.mxu0 0.0
      %1219 = vmatprep.subr.mxu0 0.0
      %1220 = vmatpush1.msra.mxu0 0.0
      %1221 = vmatprep.subr.mxu0 0.0
      %1222 = vmatpush1.msra.mxu0 0.0
      %1223 = vmatprep.subr.mxu0 0.0
      %1224 = vmatpush1.msra.mxu0 0.0
      %1225 = vmatprep.subr.mxu0 0.0
      %1226 = vmatpush1.msra.mxu0 0.0
      %1227 = vmatprep.subr.mxu0 0.0
      %1228 = vmatpush1.msra.mxu0 0.0
      %1229 = vmatprep.subr.mxu0 0.0
      %1230 = vmatpush1.msra.mxu0 0.0
      %1231 = vmatprep.subr.mxu0 0.0
      %1232 = vmatpush1.msra.mxu0 %v1189
      %1233 = vmatprep.subr.mxu0 0.0
      %1234 = vmatpush1.msra.mxu0 %v1188
      %1235 = vmatprep.subr.mxu0 0.0
      %1236 = vmatpush1.msra.mxu0 %v1187
      %1237 = vmatprep.subr.mxu0 0.0
      %1238 = vmatpush1.msra.mxu0 %v1186
      %1239 = vmatprep.subr.mxu0 0.0
      %1240 = vmatpush1.msra.mxu0 %v1185
      %1241 = vmatprep.subr.mxu0 0.0
      %1242 = vmatpush1.msra.mxu0 %v1184
      %1243 = vmatprep.subr.mxu0 0.0
      %1244 = vmatpush1.msra.mxu0 %v1183
      %1245 = vmatprep.subr.mxu0 0.0
      %1246 = vmatpush2.msra.mxu0 0.0
      %1247 = vmatprep.subr.mxu0 0.0
      %1248 = vmatpush2.msra.mxu0 0.0
      %1249 = vmatprep.subr.mxu0 0.0
      %1250 = vmatpush2.msra.mxu0 0.0
      %1251 = vmatprep.subr.mxu0 0.0
      %1252 = vmatpush2.msra.mxu0 0.0
      %1253 = vmatprep.subr.mxu0 0.0
      %1254 = vmatpush2.msra.mxu0 0.0
      %1255 = vmatprep.subr.mxu0 0.0
      %1256 = vmatpush2.msra.mxu0 0.0
      %1257 = vmatprep.subr.mxu0 0.0
      %1258 = vmatpush2.msra.mxu0 0.0
      %1259 = vmatprep.subr.mxu0 0.0
      %1260 = vmatpush2.msra.mxu0 0.0
      %1261 = vmatprep.subr.mxu0 0.0
      %1262 = vmatpush2.msra.mxu0 0.0
      %1263 = vmatprep.subr.mxu0 0.0
      %1264 = vmatpush2.msra.mxu0 0.0
      %1265 = vmatprep.subr.mxu0 0.0
      %1266 = vmatpush2.msra.mxu0 0.0
      %1267 = vmatprep.subr.mxu0 0.0
      %1268 = vmatpush2.msra.mxu0 0.0
      %1269 = vmatprep.subr.mxu0 0.0
      %1270 = vmatpush2.msra.mxu0 0.0
      %1271 = vmatprep.subr.mxu0 0.0
      %1272 = vmatpush2.msra.mxu0 0.0
      %1273 = vmatprep.subr.mxu0 0.0
      %1274 = vmatpush2.msra.mxu0 0.0
      %1275 = vmatprep.subr.mxu0 0.0
      %1276 = vmatpush2.msra.mxu0 0.0
      %1277 = vmatprep.mubr.f32.mxu0 0.0
      %1278 = vmatmul.mubr.f32.gmra.mxu0 %v1199
      %v1279 = vpop.f32.mrf.mxu0
      %v1280 = vadd.f32 %v1195, %v1279
      %v1281 = vpop.f32.mrf.mxu0
      %1282 = vmatprep.mubr.f32.mxu0 0.0
      %1283 = vmatmul.mubr.f32.gmra.mxu0 %v1202
      %v1284 = vpop.f32.mrf.mxu0
      %v1285 = vadd.f32 %v1195, %v1284
      %v1286 = vpop.f32.mrf.mxu0
      %1287 = vmatprep.mubr.f32.mxu0 0.0
      %1288 = vmatmul.mubr.f32.gmra.mxu0 %v1205
      %v1289 = vpop.f32.mrf.mxu0
      %v1290 = vadd.f32 %v1195, %v1289
      %v1291 = vpop.f32.mrf.mxu0
      %1292 = vmatprep.mubr.f32.mxu0 0.0
      %1293 = vmatmul.mubr.f32.gmra.mxu0 %v1208
      %v1294 = vpop.f32.mrf.mxu0
      %v1295 = vadd.f32 %v1195, %v1294
      %v1296 = vpop.f32.mrf.mxu0
      %1297 = vmatprep.mubr.f32.mxu0 0.0
      %1298 = vmatmul.mubr.f32.gmra.mxu0 %v1211
      %v1299 = vpop.f32.mrf.mxu0
      %v1300 = vadd.f32 %v1195, %v1299
      %v1301 = vpop.f32.mrf.mxu0
      %1302 = vdwg.mxu0
      %v1303 = vmax.f32 %v1280, 0.0
      %v1304 = vmax.f32 %v1285, 0.0
      %v1305 = vmax.f32 %v1290, 0.0
      %v1306 = vmax.f32 %v1295, 0.0
      %v1307 = vmax.f32 %v1300, 0.0
      %v1308 = vld [vmem:[%s7] sm:$0xff]
      %v1309 = vld [vmem:[%s7 + $0x8] sm:$0xff]
      %v1310 = vld [vmem:[%s7 + $0x10] sm:$0xff]
      %v1311 = vld [vmem:[%s7 + $0x18] sm:$0xff]
      %v1312 = vld [vmem:[%s7 + $0x20] sm:$0xff]
      %v1313 = vld [vmem:[%s7 + $0x28] sm:$0xff]
      %v1314 = vld [vmem:[%s7 + $0x30] sm:$0xff]
      %v1315 = vld [vmem:[%s7 + $0x38] sm:$0xff]
      %v1316 = vld [vmem:[%s7 + $0x40] sm:$0xff]
      %v1317 = vld [vmem:[%s7 + $0x48] sm:$0xff]
      %v1318 = vld [vmem:[%s7 + $0x50] sm:$0xff]
      %v1319 = vld [vmem:[%s7 + $0x58] sm:$0xff]
      %v1320 = vld [vmem:[%s8] sm:$0x1]
      %v1322 = vlaneseq
      %v1323 = vshrl.u32 %v1322, 7
      %v1324 = vsub.s32 0, %v1323
      %v1325 = vrot.slane %v1320, %v1324
      %vm1327 = vcmask 785408
      %v1329 = vsel %vm1327, %v1303, 0
      %v1332 = vsel %vm1327, %v1304, 0
      %v1335 = vsel %vm1327, %v1305, 0
      %v1338 = vsel %vm1327, %v1306, 0
      %v1341 = vsel %vm1327, %v1307, 0
      %1343 = vmatprep.subr.mxu0 0.0
      %1344 = vmatpush1.msra.mxu0 0.0
      %1345 = vmatprep.subr.mxu0 0.0
      %1346 = vmatpush1.msra.mxu0 0.0
      %1347 = vmatprep.subr.mxu0 0.0
      %1348 = vmatpush1.msra.mxu0 0.0
      %1349 = vmatprep.subr.mxu0 0.0
      %1350 = vmatpush1.msra.mxu0 0.0
      %1351 = vmatprep.subr.mxu0 0.0
      %1352 = vmatpush1.msra.mxu0 %v1319
      %1353 = vmatprep.subr.mxu0 0.0
      %1354 = vmatpush1.msra.mxu0 %v1318
      %1355 = vmatprep.subr.mxu0 0.0
      %1356 = vmatpush1.msra.mxu0 %v1317
      %1357 = vmatprep.subr.mxu0 0.0
      %1358 = vmatpush1.msra.mxu0 %v1316
      %1359 = vmatprep.subr.mxu0 0.0
      %1360 = vmatpush1.msra.mxu0 %v1315
      %1361 = vmatprep.subr.mxu0 0.0
      %1362 = vmatpush1.msra.mxu0 %v1314
      %1363 = vmatprep.subr.mxu0 0.0
      %1364 = vmatpush1.msra.mxu0 %v1313
      %1365 = vmatprep.subr.mxu0 0.0
      %1366 = vmatpush1.msra.mxu0 %v1312
      %1367 = vmatprep.subr.mxu0 0.0
      %1368 = vmatpush1.msra.mxu0 %v1311
      %1369 = vmatprep.subr.mxu0 0.0
      %1370 = vmatpush1.msra.mxu0 %v1310
      %1371 = vmatprep.subr.mxu0 0.0
      %1372 = vmatpush1.msra.mxu0 %v1309
      %1373 = vmatprep.subr.mxu0 0.0
      %1374 = vmatpush1.msra.mxu0 %v1308
      %1375 = vmatprep.subr.mxu0 0.0
      %1376 = vmatpush2.msra.mxu0 0.0
      %1377 = vmatprep.subr.mxu0 0.0
      %1378 = vmatpush2.msra.mxu0 0.0
      %1379 = vmatprep.subr.mxu0 0.0
      %1380 = vmatpush2.msra.mxu0 0.0
      %1381 = vmatprep.subr.mxu0 0.0
      %1382 = vmatpush2.msra.mxu0 0.0
      %1383 = vmatprep.subr.mxu0 0.0
      %1384 = vmatpush2.msra.mxu0 0.0
      %1385 = vmatprep.subr.mxu0 0.0
      %1386 = vmatpush2.msra.mxu0 0.0
      %1387 = vmatprep.subr.mxu0 0.0
      %1388 = vmatpush2.msra.mxu0 0.0
      %1389 = vmatprep.subr.mxu0 0.0
      %1390 = vmatpush2.msra.mxu0 0.0
      %1391 = vmatprep.subr.mxu0 0.0
      %1392 = vmatpush2.msra.mxu0 0.0
      %1393 = vmatprep.subr.mxu0 0.0
      %1394 = vmatpush2.msra.mxu0 0.0
      %1395 = vmatprep.subr.mxu0 0.0
      %1396 = vmatpush2.msra.mxu0 0.0
      %1397 = vmatprep.subr.mxu0 0.0
      %1398 = vmatpush2.msra.mxu0 0.0
      %1399 = vmatprep.subr.mxu0 0.0
      %1400 = vmatpush2.msra.mxu0 0.0
      %1401 = vmatprep.subr.mxu0 0.0
      %1402 = vmatpush2.msra.mxu0 0.0
      %1403 = vmatprep.subr.mxu0 0.0
      %1404 = vmatpush2.msra.mxu0 0.0
      %1405 = vmatprep.subr.mxu0 0.0
      %1406 = vmatpush2.msra.mxu0 0.0
      %1407 = vmatprep.mubr.f32.mxu0 0.0
      %1408 = vmatmul.mubr.f32.gmra.mxu0 %v1329
      %v1409 = vpop.f32.mrf.mxu0
      %v1410 = vadd.f32 %v1325, %v1409
      %v1411 = vpop.f32.mrf.mxu0
      %1412 = vmatprep.mubr.f32.mxu0 0.0
      %1413 = vmatmul.mubr.f32.gmra.mxu0 %v1332
      %v1414 = vpop.f32.mrf.mxu0
      %v1415 = vadd.f32 %v1325, %v1414
      %v1416 = vpop.f32.mrf.mxu0
      %1417 = vmatprep.mubr.f32.mxu0 0.0
      %1418 = vmatmul.mubr.f32.gmra.mxu0 %v1335
      %v1419 = vpop.f32.mrf.mxu0
      %v1420 = vadd.f32 %v1325, %v1419
      %v1421 = vpop.f32.mrf.mxu0
      %1422 = vmatprep.mubr.f32.mxu0 0.0
      %1423 = vmatmul.mubr.f32.gmra.mxu0 %v1338
      %v1424 = vpop.f32.mrf.mxu0
      %v1425 = vadd.f32 %v1325, %v1424
      %v1426 = vpop.f32.mrf.mxu0
      %1427 = vmatprep.mubr.f32.mxu0 0.0
      %1428 = vmatmul.mubr.f32.gmra.mxu0 %v1341
      %v1429 = vpop.f32.mrf.mxu0
      %v1430 = vadd.f32 %v1325, %v1429
      %v1431 = vpop.f32.mrf.mxu0
      %1432 = vdwg.mxu0
      %v1433 = vmax.f32 %v1410, 0.0
      %v1434 = vmax.f32 %v1415, 0.0
      %v1435 = vmax.f32 %v1420, 0.0
      %v1436 = vmax.f32 %v1425, 0.0
      %v1437 = vmax.f32 %v1430, 0.0
      %v1438 = vld [vmem:[%s9] sm:$0xff]
      %v1439 = vld [vmem:[%s9 + $0x8] sm:$0xff]
      %v1440 = vld [vmem:[%s9 + $0x10] sm:$0xff]
      %v1441 = vld [vmem:[%s9 + $0x18] sm:$0xff]
      %v1442 = vld [vmem:[%s9 + $0x20] sm:$0xff]
      %v1443 = vld [vmem:[%s9 + $0x28] sm:$0xff]
      %v1444 = vld [vmem:[%s9 + $0x30] sm:$0xff]
      %v1445 = vld [vmem:[%s9 + $0x38] sm:$0xff]
      %v1446 = vld [vmem:[%s9 + $0x40] sm:$0xff]
      %v1447 = vld [vmem:[%s9 + $0x48] sm:$0xff]
      %v1448 = vld [vmem:[%s10] sm:$0x1]
      %v1450 = vlaneseq
      %v1451 = vshrl.u32 %v1450, 7
      %v1452 = vsub.s32 0, %v1451
      %v1453 = vrot.slane %v1448, %v1452
      %vm1455 = vcmask 654336
      %v1457 = vsel %vm1455, %v1433, 0
      %v1460 = vsel %vm1455, %v1434, 0
      %v1463 = vsel %vm1455, %v1435, 0
      %v1466 = vsel %vm1455, %v1436, 0
      %v1469 = vsel %vm1455, %v1437, 0
      %1471 = vmatprep.subr.mxu0 0.0
      %1472 = vmatpush1.msra.mxu0 0.0
      %1473 = vmatprep.subr.mxu0 0.0
      %1474 = vmatpush1.msra.mxu0 0.0
      %1475 = vmatprep.subr.mxu0 0.0
      %1476 = vmatpush1.msra.mxu0 0.0
      %1477 = vmatprep.subr.mxu0 0.0
      %1478 = vmatpush1.msra.mxu0 0.0
      %1479 = vmatprep.subr.mxu0 0.0
      %1480 = vmatpush1.msra.mxu0 0.0
      %1481 = vmatprep.subr.mxu0 0.0
      %1482 = vmatpush1.msra.mxu0 0.0
      %1483 = vmatprep.subr.mxu0 0.0
      %1484 = vmatpush1.msra.mxu0 %v1447
      %1485 = vmatprep.subr.mxu0 0.0
      %1486 = vmatpush1.msra.mxu0 %v1446
      %1487 = vmatprep.subr.mxu0 0.0
      %1488 = vmatpush1.msra.mxu0 %v1445
      %1489 = vmatprep.subr.mxu0 0.0
      %1490 = vmatpush1.msra.mxu0 %v1444
      %1491 = vmatprep.subr.mxu0 0.0
      %1492 = vmatpush1.msra.mxu0 %v1443
      %1493 = vmatprep.subr.mxu0 0.0
      %1494 = vmatpush1.msra.mxu0 %v1442
      %1495 = vmatprep.subr.mxu0 0.0
      %1496 = vmatpush1.msra.mxu0 %v1441
      %1497 = vmatprep.subr.mxu0 0.0
      %1498 = vmatpush1.msra.mxu0 %v1440
      %1499 = vmatprep.subr.mxu0 0.0
      %1500 = vmatpush1.msra.mxu0 %v1439
      %1501 = vmatprep.subr.mxu0 0.0
      %1502 = vmatpush1.msra.mxu0 %v1438
      %1503 = vmatprep.subr.mxu0 0.0
      %1504 = vmatpush2.msra.mxu0 0.0
      %1505 = vmatprep.subr.mxu0 0.0
      %1506 = vmatpush2.msra.mxu0 0.0
      %1507 = vmatprep.subr.mxu0 0.0
      %1508 = vmatpush2.msra.mxu0 0.0
      %1509 = vmatprep.subr.mxu0 0.0
      %1510 = vmatpush2.msra.mxu0 0.0
      %1511 = vmatprep.subr.mxu0 0.0
      %1512 = vmatpush2.msra.mxu0 0.0
      %1513 = vmatprep.subr.mxu0 0.0
      %1514 = vmatpush2.msra.mxu0 0.0
      %1515 = vmatprep.subr.mxu0 0.0
      %1516 = vmatpush2.msra.mxu0 0.0
      %1517 = vmatprep.subr.mxu0 0.0
      %1518 = vmatpush2.msra.mxu0 0.0
      %1519 = vmatprep.subr.mxu0 0.0
      %1520 = vmatpush2.msra.mxu0 0.0
      %1521 = vmatprep.subr.mxu0 0.0
      %1522 = vmatpush2.msra.mxu0 0.0
      %1523 = vmatprep.subr.mxu0 0.0
      %1524 = vmatpush2.msra.mxu0 0.0
      %1525 = vmatprep.subr.mxu0 0.0
      %1526 = vmatpush2.msra.mxu0 0.0
      %1527 = vmatprep.subr.mxu0 0.0
      %1528 = vmatpush2.msra.mxu0 0.0
      %1529 = vmatprep.subr.mxu0 0.0
      %1530 = vmatpush2.msra.mxu0 0.0
      %1531 = vmatprep.subr.mxu0 0.0
      %1532 = vmatpush2.msra.mxu0 0.0
      %1533 = vmatprep.subr.mxu0 0.0
      %1534 = vmatpush2.msra.mxu0 0.0
      %1535 = vmatprep.mubr.f32.mxu0 0.0
      %1536 = vmatmul.mubr.f32.gmra.mxu0 %v1457
      %v1537 = vpop.f32.mrf.mxu0
      %v1538 = vadd.f32 %v1453, %v1537
      %v1539 = vpop.f32.mrf.mxu0
      %1540 = vmatprep.mubr.f32.mxu0 0.0
      %1541 = vmatmul.mubr.f32.gmra.mxu0 %v1460
      %v1542 = vpop.f32.mrf.mxu0
      %v1543 = vadd.f32 %v1453, %v1542
      %v1544 = vpop.f32.mrf.mxu0
      %1545 = vmatprep.mubr.f32.mxu0 0.0
      %1546 = vmatmul.mubr.f32.gmra.mxu0 %v1463
      %v1547 = vpop.f32.mrf.mxu0
      %v1548 = vadd.f32 %v1453, %v1547
      %v1549 = vpop.f32.mrf.mxu0
      %1550 = vmatprep.mubr.f32.mxu0 0.0
      %1551 = vmatmul.mubr.f32.gmra.mxu0 %v1466
      %v1552 = vpop.f32.mrf.mxu0
      %v1553 = vadd.f32 %v1453, %v1552
      %v1554 = vpop.f32.mrf.mxu0
      %1555 = vmatprep.mubr.f32.mxu0 0.0
      %1556 = vmatmul.mubr.f32.gmra.mxu0 %v1469
      %v1557 = vpop.f32.mrf.mxu0
      %v1558 = vadd.f32 %v1453, %v1557
      %v1559 = vpop.f32.mrf.mxu0
      %1560 = vdwg.mxu0
      %v1561 = vmax.f32 %v1538, 0.0
      %v1562 = vmax.f32 %v1543, 0.0
      %v1563 = vmax.f32 %v1548, 0.0
      %v1564 = vmax.f32 %v1553, 0.0
      %v1565 = vmax.f32 %v1558, 0.0
      %v1566 = vld [vmem:[%s12] sm:$0x1]
      %v1567 = vld [vmem:[%s11] sm:$0xff]
      %v1568 = vld [vmem:[%s11 + $0x8] sm:$0xff]
      %v1569 = vld [vmem:[%s11 + $0x10] sm:$0xff]
      %v1570 = vld [vmem:[%s11 + $0x18] sm:$0xff]
      %v1571 = vld [vmem:[%s11 + $0x20] sm:$0xff]
      %v1572 = vld [vmem:[%s11 + $0x28] sm:$0xff]
      %v1573 = vld [vmem:[%s11 + $0x30] sm:$0xff]
      %v1574 = vld [vmem:[%s11 + $0x38] sm:$0xff]
      %vm1575 = vcmask 523264
      %v1577 = vsel %vm1575, %v1561, 0
      %1579 = vmatprep.subr.mxu0 0.0
      %1580 = vmatpush1.msra.mxu0 0.0
      %1581 = vmatprep.subr.mxu0 0.0
      %1582 = vmatpush1.msra.mxu0 0.0
      %1583 = vmatprep.subr.mxu0 0.0
      %1584 = vmatpush1.msra.mxu0 0.0
      %1585 = vmatprep.subr.mxu0 0.0
      %1586 = vmatpush1.msra.mxu0 0.0
      %1587 = vmatprep.subr.mxu0 0.0
      %1588 = vmatpush1.msra.mxu0 0.0
      %1589 = vmatprep.subr.mxu0 0.0
      %1590 = vmatpush1.msra.mxu0 0.0
      %1591 = vmatprep.subr.mxu0 0.0
      %1592 = vmatpush1.msra.mxu0 0.0
      %1593 = vmatprep.subr.mxu0 0.0
      %1594 = vmatpush1.msra.mxu0 0.0
      %1595 = vmatprep.subr.mxu0 0.0
      %1596 = vmatpush1.msra.mxu0 %v1574
      %1597 = vmatprep.subr.mxu0 0.0
      %1598 = vmatpush1.msra.mxu0 %v1573
      %1599 = vmatprep.subr.mxu0 0.0
      %1600 = vmatpush1.msra.mxu0 %v1572
      %1601 = vmatprep.subr.mxu0 0.0
      %1602 = vmatpush1.msra.mxu0 %v1571
      %1603 = vmatprep.subr.mxu0 0.0
      %1604 = vmatpush1.msra.mxu0 %v1570
      %1605 = vmatprep.subr.mxu0 0.0
      %1606 = vmatpush1.msra.mxu0 %v1569
      %1607 = vmatprep.subr.mxu0 0.0
      %1608 = vmatpush1.msra.mxu0 %v1568
      %1609 = vmatprep.subr.mxu0 0.0
      %1610 = vmatpush1.msra.mxu0 %v1567
      %1611 = vmatprep.subr.mxu0 0.0
      %1612 = vmatpush2.msra.mxu0 0.0
      %1613 = vmatprep.subr.mxu0 0.0
      %1614 = vmatpush2.msra.mxu0 0.0
      %1615 = vmatprep.subr.mxu0 0.0
      %1616 = vmatpush2.msra.mxu0 0.0
      %1617 = vmatprep.subr.mxu0 0.0
      %1618 = vmatpush2.msra.mxu0 0.0
      %1619 = vmatprep.subr.mxu0 0.0
      %1620 = vmatpush2.msra.mxu0 0.0
      %1621 = vmatprep.subr.mxu0 0.0
      %1622 = vmatpush2.msra.mxu0 0.0
      %1623 = vmatprep.subr.mxu0 0.0
      %1624 = vmatpush2.msra.mxu0 0.0
      %1625 = vmatprep.subr.mxu0 0.0
      %1626 = vmatpush2.msra.mxu0 0.0
      %1627 = vmatprep.subr.mxu0 0.0
      %1628 = vmatpush2.msra.mxu0 0.0
      %1629 = vmatprep.subr.mxu0 0.0
      %1630 = vmatpush2.msra.mxu0 0.0
      %1631 = vmatprep.subr.mxu0 0.0
      %1632 = vmatpush2.msra.mxu0 0.0
      %1633 = vmatprep.subr.mxu0 0.0
      %1634 = vmatpush2.msra.mxu0 0.0
      %1635 = vmatprep.subr.mxu0 0.0
      %1636 = vmatpush2.msra.mxu0 0.0
      %1637 = vmatprep.subr.mxu0 0.0
      %1638 = vmatpush2.msra.mxu0 0.0
      %1639 = vmatprep.subr.mxu0 0.0
      %1640 = vmatpush2.msra.mxu0 0.0
      %1641 = vmatprep.subr.mxu0 0.0
      %1642 = vmatpush2.msra.mxu0 0.0
      %1643 = vmatprep.mubr.f32.mxu0 0.0
      %1644 = vmatmul.mubr.f32.gmra.mxu0 %v1577
      %v1645 = vpop.f32.mrf.mxu0
      %v1646 = vadd.f32 0.0, %v1645
      %v1647 = vpop.f32.mrf.mxu0
      %1648 = vdwg.mxu0
      %v1650 = vlaneseq
      %v1651 = vshrl.u32 %v1650, 7
      %v1652 = vsub.s32 0, %v1651
      %v1653 = vrot.slane %v1566, %v1652
      %v1655 = vadd.f32 %v1653, %v1646
      %s1656 = scalar_lea.vmem %s11, 64
      %v1657 = vld [vmem:[%s1656] sm:$0xff]
      %v1658 = vld [vmem:[%s1656 + $0x8] sm:$0xff]
      %v1659 = vld [vmem:[%s1656 + $0x10] sm:$0xff]
      %v1660 = vld [vmem:[%s1656 + $0x18] sm:$0xff]
      %v1661 = vld [vmem:[%s1656 + $0x20] sm:$0xff]
      %v1662 = vld [vmem:[%s1656 + $0x28] sm:$0xff]
      %v1663 = vld [vmem:[%s1656 + $0x30] sm:$0xff]
      %v1664 = vld [vmem:[%s1656 + $0x38] sm:$0xff]
      %v1666 = vsel %vm1575, %v1562, 0
      %1668 = vmatprep.subr.mxu0 0.0
      %1669 = vmatpush1.msra.mxu0 0.0
      %1670 = vmatprep.subr.mxu0 0.0
      %1671 = vmatpush1.msra.mxu0 0.0
      %1672 = vmatprep.subr.mxu0 0.0
      %1673 = vmatpush1.msra.mxu0 0.0
      %1674 = vmatprep.subr.mxu0 0.0
      %1675 = vmatpush1.msra.mxu0 0.0
      %1676 = vmatprep.subr.mxu0 0.0
      %1677 = vmatpush1.msra.mxu0 0.0
      %1678 = vmatprep.subr.mxu0 0.0
      %1679 = vmatpush1.msra.mxu0 0.0
      %1680 = vmatprep.subr.mxu0 0.0
      %1681 = vmatpush1.msra.mxu0 0.0
      %1682 = vmatprep.subr.mxu0 0.0
      %1683 = vmatpush1.msra.mxu0 0.0
      %1684 = vmatprep.subr.mxu0 0.0
      %1685 = vmatpush1.msra.mxu0 %v1664
      %1686 = vmatprep.subr.mxu0 0.0
      %1687 = vmatpush1.msra.mxu0 %v1663
      %1688 = vmatprep.subr.mxu0 0.0
      %1689 = vmatpush1.msra.mxu0 %v1662
      %1690 = vmatprep.subr.mxu0 0.0
      %1691 = vmatpush1.msra.mxu0 %v1661
      %1692 = vmatprep.subr.mxu0 0.0
      %1693 = vmatpush1.msra.mxu0 %v1660
      %1694 = vmatprep.subr.mxu0 0.0
      %1695 = vmatpush1.msra.mxu0 %v1659
      %1696 = vmatprep.subr.mxu0 0.0
      %1697 = vmatpush1.msra.mxu0 %v1658
      %1698 = vmatprep.subr.mxu0 0.0
      %1699 = vmatpush1.msra.mxu0 %v1657
      %1700 = vmatprep.subr.mxu0 0.0
      %1701 = vmatpush2.msra.mxu0 0.0
      %1702 = vmatprep.subr.mxu0 0.0
      %1703 = vmatpush2.msra.mxu0 0.0
      %1704 = vmatprep.subr.mxu0 0.0
      %1705 = vmatpush2.msra.mxu0 0.0
      %1706 = vmatprep.subr.mxu0 0.0
      %1707 = vmatpush2.msra.mxu0 0.0
      %1708 = vmatprep.subr.mxu0 0.0
      %1709 = vmatpush2.msra.mxu0 0.0
      %1710 = vmatprep.subr.mxu0 0.0
      %1711 = vmatpush2.msra.mxu0 0.0
      %1712 = vmatprep.subr.mxu0 0.0
      %1713 = vmatpush2.msra.mxu0 0.0
      %1714 = vmatprep.subr.mxu0 0.0
      %1715 = vmatpush2.msra.mxu0 0.0
      %1716 = vmatprep.subr.mxu0 0.0
      %1717 = vmatpush2.msra.mxu0 0.0
      %1718 = vmatprep.subr.mxu0 0.0
      %1719 = vmatpush2.msra.mxu0 0.0
      %1720 = vmatprep.subr.mxu0 0.0
      %1721 = vmatpush2.msra.mxu0 0.0
      %1722 = vmatprep.subr.mxu0 0.0
      %1723 = vmatpush2.msra.mxu0 0.0
      %1724 = vmatprep.subr.mxu0 0.0
      %1725 = vmatpush2.msra.mxu0 0.0
      %1726 = vmatprep.subr.mxu0 0.0
      %1727 = vmatpush2.msra.mxu0 0.0
      %1728 = vmatprep.subr.mxu0 0.0
      %1729 = vmatpush2.msra.mxu0 0.0
      %1730 = vmatprep.subr.mxu0 0.0
      %1731 = vmatpush2.msra.mxu0 0.0
      %1732 = vmatprep.mubr.f32.mxu0 0.0
      %1733 = vmatmul.mubr.f32.gmra.mxu0 %v1666
      %v1734 = vpop.f32.mrf.mxu0
      %v1735 = vadd.f32 0.0, %v1734
      %v1736 = vpop.f32.mrf.mxu0
      %1737 = vdwg.mxu0
      %v1738 = vadd.f32 %v1655, %v1735
      %s1739 = scalar_lea.vmem %s11, 128
      %v1740 = vld [vmem:[%s1739] sm:$0xff]
      %v1741 = vld [vmem:[%s1739 + $0x8] sm:$0xff]
      %v1742 = vld [vmem:[%s1739 + $0x10] sm:$0xff]
      %v1743 = vld [vmem:[%s1739 + $0x18] sm:$0xff]
      %v1744 = vld [vmem:[%s1739 + $0x20] sm:$0xff]
      %v1745 = vld [vmem:[%s1739 + $0x28] sm:$0xff]
      %v1746 = vld [vmem:[%s1739 + $0x30] sm:$0xff]
      %v1747 = vld [vmem:[%s1739 + $0x38] sm:$0xff]
      %v1749 = vsel %vm1575, %v1563, 0
      %1751 = vmatprep.subr.mxu0 0.0
      %1752 = vmatpush1.msra.mxu0 0.0
      %1753 = vmatprep.subr.mxu0 0.0
      %1754 = vmatpush1.msra.mxu0 0.0
      %1755 = vmatprep.subr.mxu0 0.0
      %1756 = vmatpush1.msra.mxu0 0.0
      %1757 = vmatprep.subr.mxu0 0.0
      %1758 = vmatpush1.msra.mxu0 0.0
      %1759 = vmatprep.subr.mxu0 0.0
      %1760 = vmatpush1.msra.mxu0 0.0
      %1761 = vmatprep.subr.mxu0 0.0
      %1762 = vmatpush1.msra.mxu0 0.0
      %1763 = vmatprep.subr.mxu0 0.0
      %1764 = vmatpush1.msra.mxu0 0.0
      %1765 = vmatprep.subr.mxu0 0.0
      %1766 = vmatpush1.msra.mxu0 0.0
      %1767 = vmatprep.subr.mxu0 0.0
      %1768 = vmatpush1.msra.mxu0 %v1747
      %1769 = vmatprep.subr.mxu0 0.0
      %1770 = vmatpush1.msra.mxu0 %v1746
      %1771 = vmatprep.subr.mxu0 0.0
      %1772 = vmatpush1.msra.mxu0 %v1745
      %1773 = vmatprep.subr.mxu0 0.0
      %1774 = vmatpush1.msra.mxu0 %v1744
      %1775 = vmatprep.subr.mxu0 0.0
      %1776 = vmatpush1.msra.mxu0 %v1743
      %1777 = vmatprep.subr.mxu0 0.0
      %1778 = vmatpush1.msra.mxu0 %v1742
      %1779 = vmatprep.subr.mxu0 0.0
      %1780 = vmatpush1.msra.mxu0 %v1741
      %1781 = vmatprep.subr.mxu0 0.0
      %1782 = vmatpush1.msra.mxu0 %v1740
      %1783 = vmatprep.subr.mxu0 0.0
      %1784 = vmatpush2.msra.mxu0 0.0
      %1785 = vmatprep.subr.mxu0 0.0
      %1786 = vmatpush2.msra.mxu0 0.0
      %1787 = vmatprep.subr.mxu0 0.0
      %1788 = vmatpush2.msra.mxu0 0.0
      %1789 = vmatprep.subr.mxu0 0.0
      %1790 = vmatpush2.msra.mxu0 0.0
      %1791 = vmatprep.subr.mxu0 0.0
      %1792 = vmatpush2.msra.mxu0 0.0
      %1793 = vmatprep.subr.mxu0 0.0
      %1794 = vmatpush2.msra.mxu0 0.0
      %1795 = vmatprep.subr.mxu0 0.0
      %1796 = vmatpush2.msra.mxu0 0.0
      %1797 = vmatprep.subr.mxu0 0.0
      %1798 = vmatpush2.msra.mxu0 0.0
      %1799 = vmatprep.subr.mxu0 0.0
      %1800 = vmatpush2.msra.mxu0 0.0
      %1801 = vmatprep.subr.mxu0 0.0
      %1802 = vmatpush2.msra.mxu0 0.0
      %1803 = vmatprep.subr.mxu0 0.0
      %1804 = vmatpush2.msra.mxu0 0.0
      %1805 = vmatprep.subr.mxu0 0.0
      %1806 = vmatpush2.msra.mxu0 0.0
      %1807 = vmatprep.subr.mxu0 0.0
      %1808 = vmatpush2.msra.mxu0 0.0
      %1809 = vmatprep.subr.mxu0 0.0
      %1810 = vmatpush2.msra.mxu0 0.0
      %1811 = vmatprep.subr.mxu0 0.0
      %1812 = vmatpush2.msra.mxu0 0.0
      %1813 = vmatprep.subr.mxu0 0.0
      %1814 = vmatpush2.msra.mxu0 0.0
      %1815 = vmatprep.mubr.f32.mxu0 0.0
      %1816 = vmatmul.mubr.f32.gmra.mxu0 %v1749
      %v1817 = vpop.f32.mrf.mxu0
      %v1818 = vadd.f32 0.0, %v1817
      %v1819 = vpop.f32.mrf.mxu0
      %1820 = vdwg.mxu0
      %v1821 = vadd.f32 %v1738, %v1818
      %s1822 = scalar_lea.vmem %s11, 192
      %v1823 = vld [vmem:[%s1822] sm:$0xff]
      %v1824 = vld [vmem:[%s1822 + $0x8] sm:$0xff]
      %v1825 = vld [vmem:[%s1822 + $0x10] sm:$0xff]
      %v1826 = vld [vmem:[%s1822 + $0x18] sm:$0xff]
      %v1827 = vld [vmem:[%s1822 + $0x20] sm:$0xff]
      %v1828 = vld [vmem:[%s1822 + $0x28] sm:$0xff]
      %v1829 = vld [vmem:[%s1822 + $0x30] sm:$0xff]
      %v1830 = vld [vmem:[%s1822 + $0x38] sm:$0xff]
      %v1832 = vsel %vm1575, %v1564, 0
      %1834 = vmatprep.subr.mxu0 0.0
      %1835 = vmatpush1.msra.mxu0 0.0
      %1836 = vmatprep.subr.mxu0 0.0
      %1837 = vmatpush1.msra.mxu0 0.0
      %1838 = vmatprep.subr.mxu0 0.0
      %1839 = vmatpush1.msra.mxu0 0.0
      %1840 = vmatprep.subr.mxu0 0.0
      %1841 = vmatpush1.msra.mxu0 0.0
      %1842 = vmatprep.subr.mxu0 0.0
      %1843 = vmatpush1.msra.mxu0 0.0
      %1844 = vmatprep.subr.mxu0 0.0
      %1845 = vmatpush1.msra.mxu0 0.0
      %1846 = vmatprep.subr.mxu0 0.0
      %1847 = vmatpush1.msra.mxu0 0.0
      %1848 = vmatprep.subr.mxu0 0.0
      %1849 = vmatpush1.msra.mxu0 0.0
      %1850 = vmatprep.subr.mxu0 0.0
      %1851 = vmatpush1.msra.mxu0 %v1830
      %1852 = vmatprep.subr.mxu0 0.0
      %1853 = vmatpush1.msra.mxu0 %v1829
      %1854 = vmatprep.subr.mxu0 0.0
      %1855 = vmatpush1.msra.mxu0 %v1828
      %1856 = vmatprep.subr.mxu0 0.0
      %1857 = vmatpush1.msra.mxu0 %v1827
      %1858 = vmatprep.subr.mxu0 0.0
      %1859 = vmatpush1.msra.mxu0 %v1826
      %1860 = vmatprep.subr.mxu0 0.0
      %1861 = vmatpush1.msra.mxu0 %v1825
      %1862 = vmatprep.subr.mxu0 0.0
      %1863 = vmatpush1.msra.mxu0 %v1824
      %1864 = vmatprep.subr.mxu0 0.0
      %1865 = vmatpush1.msra.mxu0 %v1823
      %1866 = vmatprep.subr.mxu0 0.0
      %1867 = vmatpush2.msra.mxu0 0.0
      %1868 = vmatprep.subr.mxu0 0.0
      %1869 = vmatpush2.msra.mxu0 0.0
      %1870 = vmatprep.subr.mxu0 0.0
      %1871 = vmatpush2.msra.mxu0 0.0
      %1872 = vmatprep.subr.mxu0 0.0
      %1873 = vmatpush2.msra.mxu0 0.0
      %1874 = vmatprep.subr.mxu0 0.0
      %1875 = vmatpush2.msra.mxu0 0.0
      %1876 = vmatprep.subr.mxu0 0.0
      %1877 = vmatpush2.msra.mxu0 0.0
      %1878 = vmatprep.subr.mxu0 0.0
      %1879 = vmatpush2.msra.mxu0 0.0
      %1880 = vmatprep.subr.mxu0 0.0
      %1881 = vmatpush2.msra.mxu0 0.0
      %1882 = vmatprep.subr.mxu0 0.0
      %1883 = vmatpush2.msra.mxu0 0.0
      %1884 = vmatprep.subr.mxu0 0.0
      %1885 = vmatpush2.msra.mxu0 0.0
      %1886 = vmatprep.subr.mxu0 0.0
      %1887 = vmatpush2.msra.mxu0 0.0
      %1888 = vmatprep.subr.mxu0 0.0
      %1889 = vmatpush2.msra.mxu0 0.0
      %1890 = vmatprep.subr.mxu0 0.0
      %1891 = vmatpush2.msra.mxu0 0.0
      %1892 = vmatprep.subr.mxu0 0.0
      %1893 = vmatpush2.msra.mxu0 0.0
      %1894 = vmatprep.subr.mxu0 0.0
      %1895 = vmatpush2.msra.mxu0 0.0
      %1896 = vmatprep.subr.mxu0 0.0
      %1897 = vmatpush2.msra.mxu0 0.0
      %1898 = vmatprep.mubr.f32.mxu0 0.0
      %1899 = vmatmul.mubr.f32.gmra.mxu0 %v1832
      %v1900 = vpop.f32.mrf.mxu0
      %v1901 = vadd.f32 0.0, %v1900
      %v1902 = vpop.f32.mrf.mxu0
      %1903 = vdwg.mxu0
      %v1904 = vadd.f32 %v1821, %v1901
      %s1905 = scalar_lea.vmem %s11, 256
      %v1906 = vld [vmem:[%s1905] sm:$0xff]
      %v1907 = vld [vmem:[%s1905 + $0x8] sm:$0xff]
      %v1908 = vld [vmem:[%s1905 + $0x10] sm:$0xff]
      %v1909 = vld [vmem:[%s1905 + $0x18] sm:$0xff]
      %v1910 = vld [vmem:[%s1905 + $0x20] sm:$0xff]
      %v1911 = vld [vmem:[%s1905 + $0x28] sm:$0xff]
      %v1912 = vld [vmem:[%s1905 + $0x30] sm:$0xff]
      %v1913 = vld [vmem:[%s1905 + $0x38] sm:$0xff]
      %v1915 = vsel %vm1575, %v1565, 0
      %1917 = vmatprep.subr.mxu0 0.0
      %1918 = vmatpush1.msra.mxu0 0.0
      %1919 = vmatprep.subr.mxu0 0.0
      %1920 = vmatpush1.msra.mxu0 0.0
      %1921 = vmatprep.subr.mxu0 0.0
      %1922 = vmatpush1.msra.mxu0 0.0
      %1923 = vmatprep.subr.mxu0 0.0
      %1924 = vmatpush1.msra.mxu0 0.0
      %1925 = vmatprep.subr.mxu0 0.0
      %1926 = vmatpush1.msra.mxu0 0.0
      %1927 = vmatprep.subr.mxu0 0.0
      %1928 = vmatpush1.msra.mxu0 0.0
      %1929 = vmatprep.subr.mxu0 0.0
      %1930 = vmatpush1.msra.mxu0 0.0
      %1931 = vmatprep.subr.mxu0 0.0
      %1932 = vmatpush1.msra.mxu0 0.0
      %1933 = vmatprep.subr.mxu0 0.0
      %1934 = vmatpush1.msra.mxu0 %v1913
      %1935 = vmatprep.subr.mxu0 0.0
      %1936 = vmatpush1.msra.mxu0 %v1912
      %1937 = vmatprep.subr.mxu0 0.0
      %1938 = vmatpush1.msra.mxu0 %v1911
      %1939 = vmatprep.subr.mxu0 0.0
      %1940 = vmatpush1.msra.mxu0 %v1910
      %1941 = vmatprep.subr.mxu0 0.0
      %1942 = vmatpush1.msra.mxu0 %v1909
      %1943 = vmatprep.subr.mxu0 0.0
      %1944 = vmatpush1.msra.mxu0 %v1908
      %1945 = vmatprep.subr.mxu0 0.0
      %1946 = vmatpush1.msra.mxu0 %v1907
      %1947 = vmatprep.subr.mxu0 0.0
      %1948 = vmatpush1.msra.mxu0 %v1906
      %1949 = vmatprep.subr.mxu0 0.0
      %1950 = vmatpush2.msra.mxu0 0.0
      %1951 = vmatprep.subr.mxu0 0.0
      %1952 = vmatpush2.msra.mxu0 0.0
      %1953 = vmatprep.subr.mxu0 0.0
      %1954 = vmatpush2.msra.mxu0 0.0
      %1955 = vmatprep.subr.mxu0 0.0
      %1956 = vmatpush2.msra.mxu0 0.0
      %1957 = vmatprep.subr.mxu0 0.0
      %1958 = vmatpush2.msra.mxu0 0.0
      %1959 = vmatprep.subr.mxu0 0.0
      %1960 = vmatpush2.msra.mxu0 0.0
      %1961 = vmatprep.subr.mxu0 0.0
      %1962 = vmatpush2.msra.mxu0 0.0
      %1963 = vmatprep.subr.mxu0 0.0
      %1964 = vmatpush2.msra.mxu0 0.0
      %1965 = vmatprep.subr.mxu0 0.0
      %1966 = vmatpush2.msra.mxu0 0.0
      %1967 = vmatprep.subr.mxu0 0.0
      %1968 = vmatpush2.msra.mxu0 0.0
      %1969 = vmatprep.subr.mxu0 0.0
      %1970 = vmatpush2.msra.mxu0 0.0
      %1971 = vmatprep.subr.mxu0 0.0
      %1972 = vmatpush2.msra.mxu0 0.0
      %1973 = vmatprep.subr.mxu0 0.0
      %1974 = vmatpush2.msra.mxu0 0.0
      %1975 = vmatprep.subr.mxu0 0.0
      %1976 = vmatpush2.msra.mxu0 0.0
      %1977 = vmatprep.subr.mxu0 0.0
      %1978 = vmatpush2.msra.mxu0 0.0
      %1979 = vmatprep.subr.mxu0 0.0
      %1980 = vmatpush2.msra.mxu0 0.0
      %1981 = vmatprep.mubr.f32.mxu0 0.0
      %1982 = vmatmul.mubr.f32.gmra.mxu0 %v1915
      %v1983 = vpop.f32.mrf.mxu0
      %v1984 = vadd.f32 0.0, %v1983
      %v1985 = vpop.f32.mrf.mxu0
      %1986 = vdwg.mxu0
      %v1987 = vadd.f32 %v1904, %v1984
      %v1988 = vmax.f32 %v1987, 0.0
      %v1989 = vld [vmem:[%s13] sm:$0xff]
      %v1990 = vld [vmem:[%s13 + $0x8] sm:$0xff]
      %v1991 = vld [vmem:[%s13 + $0x10] sm:$0xff]
      %v1992 = vld [vmem:[%s13 + $0x18] sm:$0xf]
      %v1993 = vld [vmem:[%s14] sm:$0x1]
      %v1995 = vlaneseq
      %v1996 = vshrl.u32 %v1995, 7
      %v1997 = vsub.s32 0, %v1996
      %v1998 = vrot.slane %v1993, %v1997
      %vm2000 = vcmask 228352
      %v2002 = vsel %vm2000, %v1988, 0
      %vm2004 = vcmask 1043456
      %v2006 = vsel %vm2004, %v1992, 0
      %2008 = vmatprep.subr.mxu0 0.0
      %2009 = vmatpush1.msra.mxu0 0.0
      %2010 = vmatprep.subr.mxu0 0.0
      %2011 = vmatpush1.msra.mxu0 0.0
      %2012 = vmatprep.subr.mxu0 0.0
      %2013 = vmatpush1.msra.mxu0 0.0
      %2014 = vmatprep.subr.mxu0 0.0
      %2015 = vmatpush1.msra.mxu0 0.0
      %2016 = vmatprep.subr.mxu0 0.0
      %2017 = vmatpush1.msra.mxu0 0.0
      %2018 = vmatprep.subr.mxu0 0.0
      %2019 = vmatpush1.msra.mxu0 0.0
      %2020 = vmatprep.subr.mxu0 0.0
      %2021 = vmatpush1.msra.mxu0 0.0
      %2022 = vmatprep.subr.mxu0 0.0
      %2023 = vmatpush1.msra.mxu0 0.0
      %2024 = vmatprep.subr.mxu0 0.0
      %2025 = vmatpush1.msra.mxu0 0.0
      %2026 = vmatprep.subr.mxu0 0.0
      %2027 = vmatpush1.msra.mxu0 0.0
      %2028 = vmatprep.subr.mxu0 0.0
      %2029 = vmatpush1.msra.mxu0 0.0
      %2030 = vmatprep.subr.mxu0 0.0
      %2031 = vmatpush1.msra.mxu0 0.0
      %2032 = vmatprep.subr.mxu0 0.0
      %2033 = vmatpush1.msra.mxu0 %v2006
      %2034 = vmatprep.subr.mxu0 0.0
      %2035 = vmatpush1.msra.mxu0 %v1991
      %2036 = vmatprep.subr.mxu0 0.0
      %2037 = vmatpush1.msra.mxu0 %v1990
      %2038 = vmatprep.subr.mxu0 0.0
      %2039 = vmatpush1.msra.mxu0 %v1989
      %2040 = vmatprep.subr.mxu0 0.0
      %2041 = vmatpush2.msra.mxu0 0.0
      %2042 = vmatprep.subr.mxu0 0.0
      %2043 = vmatpush2.msra.mxu0 0.0
      %2044 = vmatprep.subr.mxu0 0.0
      %2045 = vmatpush2.msra.mxu0 0.0
      %2046 = vmatprep.subr.mxu0 0.0
      %2047 = vmatpush2.msra.mxu0 0.0
      %2048 = vmatprep.subr.mxu0 0.0
      %2049 = vmatpush2.msra.mxu0 0.0
      %2050 = vmatprep.subr.mxu0 0.0
      %2051 = vmatpush2.msra.mxu0 0.0
      %2052 = vmatprep.subr.mxu0 0.0
      %2053 = vmatpush2.msra.mxu0 0.0
      %2054 = vmatprep.subr.mxu0 0.0
      %2055 = vmatpush2.msra.mxu0 0.0
      %2056 = vmatprep.subr.mxu0 0.0
      %2057 = vmatpush2.msra.mxu0 0.0
      %2058 = vmatprep.subr.mxu0 0.0
      %2059 = vmatpush2.msra.mxu0 0.0
      %2060 = vmatprep.subr.mxu0 0.0
      %2061 = vmatpush2.msra.mxu0 0.0
      %2062 = vmatprep.subr.mxu0 0.0
      %2063 = vmatpush2.msra.mxu0 0.0
      %2064 = vmatprep.subr.mxu0 0.0
      %2065 = vmatpush2.msra.mxu0 0.0
      %2066 = vmatprep.subr.mxu0 0.0
      %2067 = vmatpush2.msra.mxu0 0.0
      %2068 = vmatprep.subr.mxu0 0.0
      %2069 = vmatpush2.msra.mxu0 0.0
      %2070 = vmatprep.subr.mxu0 0.0
      %2071 = vmatpush2.msra.mxu0 0.0
      %2072 = vmatprep.mubr.f32.mxu0 0.0
      %2073 = vmatmul.mubr.f32.gmra.mxu0 %v2002
      %v2074 = vpop.f32.mrf.mxu0
      %v2075 = vadd.f32 %v1998, %v2074
      %v2076 = vpop.f32.mrf.mxu0
      %2077 = vdwg.mxu0
      %v2078 = vmax.f32 %v2075, 0.0
      %v2079 = vld [vmem:[%s15] sm:$0xff]
      %v2080 = vld [vmem:[%s15 + $0x8] sm:$0xf]
      %v2081 = vld [vmem:[%s16] sm:$0x1]
      %v2083 = vlaneseq
      %v2084 = vshrl.u32 %v2083, 7
      %v2085 = vsub.s32 0, %v2084
      %v2086 = vrot.slane %v2081, %v2085
      %vm2088 = vcmask 97280
      %v2090 = vsel %vm2088, %v2078, 0
      %v2093 = vsel %vm2004, %v2080, 0
      %2095 = vmatprep.subr.mxu0 0.0
      %2096 = vmatpush1.msra.mxu0 0.0
      %2097 = vmatprep.subr.mxu0 0.0
      %2098 = vmatpush1.msra.mxu0 0.0
      %2099 = vmatprep.subr.mxu0 0.0
      %2100 = vmatpush1.msra.mxu0 0.0
      %2101 = vmatprep.subr.mxu0 0.0
      %2102 = vmatpush1.msra.mxu0 0.0
      %2103 = vmatprep.subr.mxu0 0.0
      %2104 = vmatpush1.msra.mxu0 0.0
      %2105 = vmatprep.subr.mxu0 0.0
      %2106 = vmatpush1.msra.mxu0 0.0
      %2107 = vmatprep.subr.mxu0 0.0
      %2108 = vmatpush1.msra.mxu0 0.0
      %2109 = vmatprep.subr.mxu0 0.0
      %2110 = vmatpush1.msra.mxu0 0.0
      %2111 = vmatprep.subr.mxu0 0.0
      %2112 = vmatpush1.msra.mxu0 0.0
      %2113 = vmatprep.subr.mxu0 0.0
      %2114 = vmatpush1.msra.mxu0 0.0
      %2115 = vmatprep.subr.mxu0 0.0
      %2116 = vmatpush1.msra.mxu0 0.0
      %2117 = vmatprep.subr.mxu0 0.0
      %2118 = vmatpush1.msra.mxu0 0.0
      %2119 = vmatprep.subr.mxu0 0.0
      %2120 = vmatpush1.msra.mxu0 0.0
      %2121 = vmatprep.subr.mxu0 0.0
      %2122 = vmatpush1.msra.mxu0 0.0
      %2123 = vmatprep.subr.mxu0 0.0
      %2124 = vmatpush1.msra.mxu0 %v2093
      %2125 = vmatprep.subr.mxu0 0.0
      %2126 = vmatpush1.msra.mxu0 %v2079
      %2127 = vmatprep.subr.mxu0 0.0
      %2128 = vmatpush2.msra.mxu0 0.0
      %2129 = vmatprep.subr.mxu0 0.0
      %2130 = vmatpush2.msra.mxu0 0.0
      %2131 = vmatprep.subr.mxu0 0.0
      %2132 = vmatpush2.msra.mxu0 0.0
      %2133 = vmatprep.subr.mxu0 0.0
      %2134 = vmatpush2.msra.mxu0 0.0
      %2135 = vmatprep.subr.mxu0 0.0
      %2136 = vmatpush2.msra.mxu0 0.0
      %2137 = vmatprep.subr.mxu0 0.0
      %2138 = vmatpush2.msra.mxu0 0.0
      %2139 = vmatprep.subr.mxu0 0.0
      %2140 = vmatpush2.msra.mxu0 0.0
      %2141 = vmatprep.subr.mxu0 0.0
      %2142 = vmatpush2.msra.mxu0 0.0
      %2143 = vmatprep.subr.mxu0 0.0
      %2144 = vmatpush2.msra.mxu0 0.0
      %2145 = vmatprep.subr.mxu0 0.0
      %2146 = vmatpush2.msra.mxu0 0.0
      %2147 = vmatprep.subr.mxu0 0.0
      %2148 = vmatpush2.msra.mxu0 0.0
      %2149 = vmatprep.subr.mxu0 0.0
      %2150 = vmatpush2.msra.mxu0 0.0
      %2151 = vmatprep.subr.mxu0 0.0
      %2152 = vmatpush2.msra.mxu0 0.0
      %2153 = vmatprep.subr.mxu0 0.0
      %2154 = vmatpush2.msra.mxu0 0.0
      %2155 = vmatprep.subr.mxu0 0.0
      %2156 = vmatpush2.msra.mxu0 0.0
      %2157 = vmatprep.subr.mxu0 0.0
      %2158 = vmatpush2.msra.mxu0 0.0
      %2159 = vmatprep.mubr.f32.mxu0 0.0
      %2160 = vmatmul.mubr.f32.gmra.mxu0 %v2090
      %v2161 = vpop.f32.mrf.mxu0
      %v2162 = vadd.f32 %v2086, %v2161
      %v2163 = vpop.f32.mrf.mxu0
      %2164 = vdwg.mxu0
      %v2165 = vmax.f32 %v2162, 0.0
      %v2166 = vld [vmem:[%s17] sm:$0xff]
      %v2167 = vld [vmem:[%s17 + $0x8] sm:$0x3]
      %v2168 = vld [vmem:[%s18] sm:$0x1]
      %v2170 = vlaneseq
      %v2171 = vshrl.u32 %v2170, 7
      %v2172 = vsub.s32 0, %v2171
      %v2173 = vrot.slane %v2168, %v2172
      %vm2175 = vcmask 80896
      %v2177 = vsel %vm2175, %v2165, 0
      %vm2179 = vcmask 1041408
      %v2181 = vsel %vm2179, %v2167, 0
      %2183 = vmatprep.subr.mxu0 0.0
      %2184 = vmatpush1.msra.mxu0 0.0
      %2185 = vmatprep.subr.mxu0 0.0
      %2186 = vmatpush1.msra.mxu0 0.0
      %2187 = vmatprep.subr.mxu0 0.0
      %2188 = vmatpush1.msra.mxu0 0.0
      %2189 = vmatprep.subr.mxu0 0.0
      %2190 = vmatpush1.msra.mxu0 0.0
      %2191 = vmatprep.subr.mxu0 0.0
      %2192 = vmatpush1.msra.mxu0 0.0
      %2193 = vmatprep.subr.mxu0 0.0
      %2194 = vmatpush1.msra.mxu0 0.0
      %2195 = vmatprep.subr.mxu0 0.0
      %2196 = vmatpush1.msra.mxu0 0.0
      %2197 = vmatprep.subr.mxu0 0.0
      %2198 = vmatpush1.msra.mxu0 0.0
      %2199 = vmatprep.subr.mxu0 0.0
      %2200 = vmatpush1.msra.mxu0 0.0
      %2201 = vmatprep.subr.mxu0 0.0
      %2202 = vmatpush1.msra.mxu0 0.0
      %2203 = vmatprep.subr.mxu0 0.0
      %2204 = vmatpush1.msra.mxu0 0.0
      %2205 = vmatprep.subr.mxu0 0.0
      %2206 = vmatpush1.msra.mxu0 0.0
      %2207 = vmatprep.subr.mxu0 0.0
      %2208 = vmatpush1.msra.mxu0 0.0
      %2209 = vmatprep.subr.mxu0 0.0
      %2210 = vmatpush1.msra.mxu0 0.0
      %2211 = vmatprep.subr.mxu0 0.0
      %2212 = vmatpush1.msra.mxu0 %v2181
      %2213 = vmatprep.subr.mxu0 0.0
      %2214 = vmatpush1.msra.mxu0 %v2166
      %2215 = vmatprep.subr.mxu0 0.0
      %2216 = vmatpush2.msra.mxu0 0.0
      %2217 = vmatprep.subr.mxu0 0.0
      %2218 = vmatpush2.msra.mxu0 0.0
      %2219 = vmatprep.subr.mxu0 0.0
      %2220 = vmatpush2.msra.mxu0 0.0
      %2221 = vmatprep.subr.mxu0 0.0
      %2222 = vmatpush2.msra.mxu0 0.0
      %2223 = vmatprep.subr.mxu0 0.0
      %2224 = vmatpush2.msra.mxu0 0.0
      %2225 = vmatprep.subr.mxu0 0.0
      %2226 = vmatpush2.msra.mxu0 0.0
      %2227 = vmatprep.subr.mxu0 0.0
      %2228 = vmatpush2.msra.mxu0 0.0
      %2229 = vmatprep.subr.mxu0 0.0
      %2230 = vmatpush2.msra.mxu0 0.0
      %2231 = vmatprep.subr.mxu0 0.0
      %2232 = vmatpush2.msra.mxu0 0.0
      %2233 = vmatprep.subr.mxu0 0.0
      %2234 = vmatpush2.msra.mxu0 0.0
      %2235 = vmatprep.subr.mxu0 0.0
      %2236 = vmatpush2.msra.mxu0 0.0
      %2237 = vmatprep.subr.mxu0 0.0
      %2238 = vmatpush2.msra.mxu0 0.0
      %2239 = vmatprep.subr.mxu0 0.0
      %2240 = vmatpush2.msra.mxu0 0.0
      %2241 = vmatprep.subr.mxu0 0.0
      %2242 = vmatpush2.msra.mxu0 0.0
      %2243 = vmatprep.subr.mxu0 0.0
      %2244 = vmatpush2.msra.mxu0 0.0
      %2245 = vmatprep.subr.mxu0 0.0
      %2246 = vmatpush2.msra.mxu0 0.0
      %2247 = vmatprep.mubr.f32.mxu0 0.0
      %2248 = vmatmul.mubr.f32.gmra.mxu0 %v2177
      %v2249 = vpop.f32.mrf.mxu0
      %v2250 = vadd.f32 %v2173, %v2249
      %v2251 = vpop.f32.mrf.mxu0
      %2252 = vdwg.mxu0
      %v2253 = vmax.f32 %v2250, 0.0
      %v2254 = vld [vmem:[%s19] sm:$0xff]
      %v2255 = vld [vmem:[%s20] sm:$0x1]
      %v2257 = vlaneseq
      %v2258 = vshrl.u32 %v2257, 7
      %v2259 = vsub.s32 0, %v2258
      %v2260 = vrot.slane %v2255, %v2259
      %vm2262 = vcmask 64512
      %v2264 = vsel %vm2262, %v2253, 0
      %2266 = vmatprep.subr.mxu0 0.0
      %2267 = vmatpush1.msra.mxu0 0.0
      %2268 = vmatprep.subr.mxu0 0.0
      %2269 = vmatpush1.msra.mxu0 0.0
      %2270 = vmatprep.subr.mxu0 0.0
      %2271 = vmatpush1.msra.mxu0 0.0
      %2272 = vmatprep.subr.mxu0 0.0
      %2273 = vmatpush1.msra.mxu0 0.0
      %2274 = vmatprep.subr.mxu0 0.0
      %2275 = vmatpush1.msra.mxu0 0.0
      %2276 = vmatprep.subr.mxu0 0.0
      %2277 = vmatpush1.msra.mxu0 0.0
      %2278 = vmatprep.subr.mxu0 0.0
      %2279 = vmatpush1.msra.mxu0 0.0
      %2280 = vmatprep.subr.mxu0 0.0
      %2281 = vmatpush1.msra.mxu0 0.0
      %2282 = vmatprep.subr.mxu0 0.0
      %2283 = vmatpush1.msra.mxu0 0.0
      %2284 = vmatprep.subr.mxu0 0.0
      %2285 = vmatpush1.msra.mxu0 0.0
      %2286 = vmatprep.subr.mxu0 0.0
      %2287 = vmatpush1.msra.mxu0 0.0
      %2288 = vmatprep.subr.mxu0 0.0
      %2289 = vmatpush1.msra.mxu0 0.0
      %2290 = vmatprep.subr.mxu0 0.0
      %2291 = vmatpush1.msra.mxu0 0.0
      %2292 = vmatprep.subr.mxu0 0.0
      %2293 = vmatpush1.msra.mxu0 0.0
      %2294 = vmatprep.subr.mxu0 0.0
      %2295 = vmatpush1.msra.mxu0 0.0
      %2296 = vmatprep.subr.mxu0 0.0
      %2297 = vmatpush1.msra.mxu0 %v2254
      %2298 = vmatprep.subr.mxu0 0.0
      %2299 = vmatpush2.msra.mxu0 0.0
      %2300 = vmatprep.subr.mxu0 0.0
      %2301 = vmatpush2.msra.mxu0 0.0
      %2302 = vmatprep.subr.mxu0 0.0
      %2303 = vmatpush2.msra.mxu0 0.0
      %2304 = vmatprep.subr.mxu0 0.0
      %2305 = vmatpush2.msra.mxu0 0.0
      %2306 = vmatprep.subr.mxu0 0.0
      %2307 = vmatpush2.msra.mxu0 0.0
      %2308 = vmatprep.subr.mxu0 0.0
      %2309 = vmatpush2.msra.mxu0 0.0
      %2310 = vmatprep.subr.mxu0 0.0
      %2311 = vmatpush2.msra.mxu0 0.0
      %2312 = vmatprep.subr.mxu0 0.0
      %2313 = vmatpush2.msra.mxu0 0.0
      %2314 = vmatprep.subr.mxu0 0.0
      %2315 = vmatpush2.msra.mxu0 0.0
      %2316 = vmatprep.subr.mxu0 0.0
      %2317 = vmatpush2.msra.mxu0 0.0
      %2318 = vmatprep.subr.mxu0 0.0
      %2319 = vmatpush2.msra.mxu0 0.0
      %2320 = vmatprep.subr.mxu0 0.0
      %2321 = vmatpush2.msra.mxu0 0.0
      %2322 = vmatprep.subr.mxu0 0.0
      %2323 = vmatpush2.msra.mxu0 0.0
      %2324 = vmatprep.subr.mxu0 0.0
      %2325 = vmatpush2.msra.mxu0 0.0
      %2326 = vmatprep.subr.mxu0 0.0
      %2327 = vmatpush2.msra.mxu0 0.0
      %2328 = vmatprep.subr.mxu0 0.0
      %2329 = vmatpush2.msra.mxu0 0.0
      %2330 = vmatprep.mubr.f32.mxu0 0.0
      %2331 = vmatmul.mubr.f32.gmra.mxu0 %v2264
      %v2332 = vpop.f32.mrf.mxu0
      %v2333 = vadd.f32 %v2260, %v2332
      %v2334 = vpop.f32.mrf.mxu0
      %2335 = vdwg.mxu0
      %2336 = vst [vmem:[%s659] sm:$0xff] %v2333
      %p2337 = scmp.lt.s32.totalorder %s32, 1
      %s2338 = scalar_select %p2337, %s32, 1
      %s2339 = smul.addr %s2338, 8
      %s2340 = scalar_lea.vmem %s21, %s2339
      // Predicated region
      $region105: #{tit_forward.1} parent=103 // pred_check
        %p2341 = pneg %p496
      $region106: #{tit_forward.1} parent=103 // pred_check_branch
        %2343 = sbr.rel (%p2341) target = $region108
      $region107: #{tit_forward.1} parent=103 // pred_region
        _
      $region108: #{tit_forward.1} parent=103 // pred_fallthru
        _
    $region104: #{tit_forward.1} parent=5 // pred_fallthru
      _
    %p2344 = scmp.le.s32.totalorder 2, %s27
    // Predicated region
    $region109: #{tit_forward.1} parent=5 // pred_check
      %p2345 = pneg %p2344
    $region110: #{tit_forward.1} parent=5 // pred_check_branch
      %2347 = sbr.rel (%p2345) target = $region112
    $region111: #{tit_forward.1} parent=5 // pred_region
      %s2348 = ssub.s32 %s27, 2
      // Predicated region
      $region113: #{tit_forward.1} parent=111 // pred_check
        %p2349 = pneg %p502
      $region114: #{tit_forward.1} parent=111 // pred_check_branch
        %2351 = sbr.rel (%p2349) target = $region116
      $region115: #{tit_forward.1} parent=111 // pred_region
        %p2352 = scmp.lt.s32.totalorder %s33, 1
        %s2353 = scalar_select %p2352, %s33, 1
        %s2354 = smul.addr %s2353, 8
        %s2355 = scalar_lea.vmem %s21, %s2354
      $region116: #{tit_forward.1} parent=111 // pred_fallthru
        _
    $region112: #{tit_forward.1} parent=5 // pred_fallthru
      _
  $region6: #{tit_forward.1} parent=0 // loop_footer
    %s31 = sadd.s32 1, %s27
  $region7: #{tit_forward.1} parent=0 // loop_footer_branch
    %26 = sbr.rel target = $region3
  $region8: #{tit_forward.1} parent=0 // loop_exit
    _

</llo_original>
